<compile_context>
chip_gen: v7x
topology: tpu7x:2x2x1
jax: 0.10.0
libtpu: 0.0.40
codegen_flags: <defaults>
</compile_context>

<pallas_src>
import math

import jax
import jax.numpy as jnp
from jax.experimental import pallas as pl
from jax.experimental.pallas import tpu as pltpu

# ------------------------- model hyper-params ------------------------------
HIDDEN1 = 6      # conv1 out channels
HIDDEN2 = 16     # conv2 out channels
HIDDEN3 = 400    # flatten size (16 * 5 * 5)  -> implies 28x28 input
HIDDEN4 = 120
HIDDEN5 = 84
INPUT_C = 1
KSIZE = 5
OUTSIZE = 10
POOL = 2
PAD1 = 2

IMG = 28                       # forced by hiddensize3 = 400 = 16*5*5
H1P = IMG + 2 * PAD1           # 32  (padded conv1 input)
C1OUT = H1P - KSIZE + 1        # 28  (conv1 output H/W)
P1OUT = C1OUT // POOL          # 14
C2OUT = P1OUT - KSIZE + 1      # 10
P2OUT = C2OUT // POOL          # 5
assert HIDDEN2 * P2OUT * P2OUT == HIDDEN3

# float32 = exact parity with torch; jnp.bfloat16 = bf16 MXU path (f32 accum).
COMPUTE_DTYPE = jnp.float32


# ----------------------------- fused kernel --------------------------------
def _lenet_fused_kernel(x_ref, cb1_ref, bias1_ref, plr1_ref, plc1_ref,
                        cb2_ref, bias2_ref, plr2_ref, plc2_ref,
                        w1_ref, b1_ref, w2_ref, b2_ref, w3_ref, b3_ref,
                        o_ref):
    """Whole LeNet forward for one sample; all intermediates stay on-chip."""

    def mm(a, b):
        return jnp.dot(a.astype(COMPUTE_DTYPE), b.astype(COMPUTE_DTYPE),
                       preferred_element_type=jnp.float32)

    def sigmoid(v):
        return 1.0 / (1.0 + jnp.exp(-v))

    # ---- conv1 as one banded matmul (in-kernel im2col over rows) ----------
    rows1 = []
    for ic in range(INPUT_C):
        xc = x_ref[0, ic, :, :].astype(jnp.float32)            # [32, 32]
        for i in range(KSIZE):
            rows1.append(xc[i:i + C1OUT, :])                   # [28, 32]
    P1 = jnp.concatenate(rows1, axis=1)                        # [28, IC*5*32]
    h1 = sigmoid(mm(P1, cb1_ref[...]) + bias1_ref[...])        # [28, 6*28]

    # ---- 2x2 avg pool fused as two small matmuls ---------------------------
    p1 = mm(mm(plr1_ref[...], h1), plc1_ref[...])              # [14, 6*14]

    # ---- conv2 as one banded matmul ----------------------------------------
    rows2 = []
    for ic in range(HIDDEN1):
        for i in range(KSIZE):
            rows2.append(p1[i:i + C2OUT, ic * P1OUT:(ic + 1) * P1OUT])  # [10,14]
    P2 = jnp.concatenate(rows2, axis=1)                        # [10, 6*5*14]
    h2 = sigmoid(mm(P2, cb2_ref[...]) + bias2_ref[...])        # [10, 16*10]

    # ---- pool2 --------------------------------------------------------------
    p2 = mm(mm(plr2_ref[...], h2), plc2_ref[...])              # [5, 16*5]

    # ---- flatten (torch NCHW order is folded into the linear1 weight) ------
    flat = jnp.concatenate([p2[ph:ph + 1, :] for ph in range(P2OUT)],
                           axis=1)                             # [1, 400]

    # ---- linear stack -------------------------------------------------------
    z1 = sigmoid(mm(flat, w1_ref[...]) + b1_ref[...])          # [1, 120]
    z2 = sigmoid(mm(z1, w2_ref[...]) + b2_ref[...])            # [1, 84]
    z3 = mm(z2, w3_ref[...]) + b3_ref[...]                     # [1, 10]
    o_ref[...] = z3[None].astype(o_ref.dtype)                  # [1, 1, 10]


# ------------------------- one-time weight prep -----------------------------
def _pool_rows(n):
    """[n//POOL, n] matrix with 1/POOL entries: left-multiply = pool rows."""
    ph = n // POOL
    a = jnp.arange(n)[None, :]
    p = jnp.arange(ph)[:, None]
    m = (a >= POOL * p) & (a < POOL * p + POOL)
    return jnp.where(m, 1.0 / POOL, 0.0).astype(jnp.float32)


def _conv_band(w_oihw, w_in):
    """Torch conv weight [OC,IC,KH,KW] -> banded matrix [(IC*KH)*w_in, OC*w_out]
    so that (shifted-row im2col) @ band == valid cross-correlation output."""
    OC, IC, KH, KW = w_oihw.shape
    w_out = w_in - KW + 1
    r = jnp.arange(w_in)[:, None]
    c = jnp.arange(w_out)[None, :]
    d = r - c                                                 # tap index j = r - c
    valid = (d >= 0) & (d < KW)
    taps = w_oihw[:, :, :, jnp.clip(d, 0, KW - 1)]            # [OC,IC,KH,w_in,w_out]
    taps = jnp.where(valid[None, None, None], taps, 0.0)
    taps = jnp.transpose(taps, (1, 2, 3, 0, 4))               # [IC,KH,w_in,OC,w_out]
    return taps.reshape(IC * KH * w_in, OC * w_out)


def prepare_params(p):
    """Hoists every reshape/transpose/permutation out of the hot path."""
    cd, f32 = COMPUTE_DTYPE, jnp.float32
    prep = {}
    # conv1
    prep["cb1"] = _conv_band(p["c1w"].astype(f32), H1P).astype(cd)            # [160, 168]
    prep["bias1"] = jnp.repeat(p["c1b"].astype(f32), C1OUT)[None, :]          # [1, 168]
    prep["plr1"] = _pool_rows(C1OUT).astype(cd)                               # [14, 28]
    prep["plc1"] = jnp.kron(jnp.eye(HIDDEN1, dtype=f32),
                            _pool_rows(C1OUT).T).astype(cd)                   # [168, 84]
    # conv2
    prep["cb2"] = _conv_band(p["c2w"].astype(f32), P1OUT).astype(cd)          # [420, 160]
    prep["bias2"] = jnp.repeat(p["c2b"].astype(f32), C2OUT)[None, :]          # [1, 160]
    prep["plr2"] = _pool_rows(C2OUT).astype(cd)                               # [5, 10]
    prep["plc2"] = jnp.kron(jnp.eye(HIDDEN2, dtype=f32),
                            _pool_rows(C2OUT).T).astype(cd)                   # [160, 80]
    # linear1 with the torch flatten (oc,ph,pw) permutation folded in:
    # in-kernel flat index = ph*(16*5) + oc*5 + pw
    w1 = p["l1w"].astype(f32).reshape(HIDDEN4, HIDDEN2, P2OUT, P2OUT)         # [n,oc,ph,pw]
    w1 = jnp.transpose(w1, (2, 1, 3, 0)).reshape(HIDDEN3, HIDDEN4)            # [400, 120]
    prep["w1"] = w1.astype(cd)
    prep["b1"] = p["l1b"].astype(f32)[None, :]
    prep["w2"] = p["l2w"].astype(f32).T.astype(cd)                            # [120, 84]
    prep["b2"] = p["l2b"].astype(f32)[None, :]
    prep["w3"] = p["l3w"].astype(f32).T.astype(cd)                            # [84, 10]
    prep["b3"] = p["l3b"].astype(f32)[None, :]
    return prep


# ------------------------------ parameters ----------------------------------
def init_params(key):
    def uniform(key, shape, fan_in):
        bound = 1.0 / math.sqrt(fan_in)
        return jax.random.uniform(key, shape, jnp.float32, -bound, bound)

    ks = jax.random.split(key, 10)
    p = {}
    p["c1w"] = uniform(ks[0], (HIDDEN1, INPUT_C, KSIZE, KSIZE), INPUT_C * KSIZE * KSIZE)
    p["c1b"] = uniform(ks[1], (HIDDEN1,), INPUT_C * KSIZE * KSIZE)
    p["c2w"] = uniform(ks[2], (HIDDEN2, HIDDEN1, KSIZE, KSIZE), HIDDEN1 * KSIZE * KSIZE)
    p["c2b"] = uniform(ks[3], (HIDDEN2,), HIDDEN1 * KSIZE * KSIZE)
    p["l1w"] = uniform(ks[4], (HIDDEN4, HIDDEN3), HIDDEN3)   # torch layout [out, in]
    p["l1b"] = uniform(ks[5], (HIDDEN4,), HIDDEN3)
    p["l2w"] = uniform(ks[6], (HIDDEN5, HIDDEN4), HIDDEN4)
    p["l2b"] = uniform(ks[7], (HIDDEN5,), HIDDEN4)
    p["l3w"] = uniform(ks[8], (OUTSIZE, HIDDEN5), HIDDEN5)
    p["l3b"] = uniform(ks[9], (OUTSIZE,), HIDDEN5)
    return p


# -------------------------------- forward ------------------------------------
def forward(x_nchw, prep):
    B = x_nchw.shape[0]
    # the only XLA glue: pad the raw input for conv1's padding=2
    xp = jnp.pad(x_nchw.astype(jnp.float32),
                 ((0, 0), (0, 0), (PAD1, PAD1), (PAD1, PAD1)))   # [B, 1, 32, 32]

    weight_names = ["cb1", "bias1", "plr1", "plc1", "cb2", "bias2", "plr2",
                    "plc2", "w1", "b1", "w2", "b2", "w3", "b3"]
    weights = [prep[k] for k in weight_names]

    def full2d(arr):
        return pl.BlockSpec(arr.shape, lambda b: (0, 0))

    out = pl.pallas_call(
        _lenet_fused_kernel,
        out_shape=jax.ShapeDtypeStruct((B, 1, OUTSIZE), jnp.float32),
        grid=(B,),
        in_specs=[pl.BlockSpec((1, INPUT_C, H1P, H1P), lambda b: (b, 0, 0, 0))]
                 + [full2d(w) for w in weights],
        out_specs=pl.BlockSpec((1, 1, OUTSIZE), lambda b: (b, 0, 0)),
        compiler_params=pltpu.CompilerParams(
            dimension_semantics=("parallel",)),
    )(xp, *weights)
    return out.reshape(B, OUTSIZE)


# --------------------------------- main ---------------------------------------
if __name__ == "__main__":
    key = jax.random.PRNGKey(0)
    k_params, k_x = jax.random.split(key)
    params = init_params(k_params)
    prep = prepare_params(params)

    # hiddensize3 = 400 = 16*5*5 forces a 28x28 input (LeNet/MNIST geometry)
    x = jax.random.normal(k_x, (2, INPUT_C, IMG, IMG), jnp.float32)

    fwd = jax.jit(forward)
    out = jax.block_until_ready(fwd(x, prep))
    assert out.shape == (2, OUTSIZE), out.shape
    assert bool(jnp.all(jnp.isfinite(out)))
    print("KERNEL_OK")
</pallas_src>

<mosaic_0001>
module attributes {stable_mosaic.version = 11 : i64} {
  func.func @_lenet_fused_kernel(%arg0: i32, %arg1: memref<1x1x32x32xf32, #tpu.memory_space<vmem>>, %arg2: memref<160x168xf32, #tpu.memory_space<vmem>>, %arg3: memref<1x168xf32, #tpu.memory_space<vmem>>, %arg4: memref<14x28xf32, #tpu.memory_space<vmem>>, %arg5: memref<168x84xf32, #tpu.memory_space<vmem>>, %arg6: memref<420x160xf32, #tpu.memory_space<vmem>>, %arg7: memref<1x160xf32, #tpu.memory_space<vmem>>, %arg8: memref<5x10xf32, #tpu.memory_space<vmem>>, %arg9: memref<160x80xf32, #tpu.memory_space<vmem>>, %arg10: memref<400x120xf32, #tpu.memory_space<vmem>>, %arg11: memref<1x120xf32, #tpu.memory_space<vmem>>, %arg12: memref<120x84xf32, #tpu.memory_space<vmem>>, %arg13: memref<1x84xf32, #tpu.memory_space<vmem>>, %arg14: memref<84x10xf32, #tpu.memory_space<vmem>>, %arg15: memref<1x10xf32, #tpu.memory_space<vmem>>, %arg16: memref<1x1x10xf32, #tpu.memory_space<vmem>>) attributes {dimension_semantics = [#tpu.dimension_semantics<parallel>], iteration_bounds = array<i64: 2>, scalar_prefetch = 0 : i64, scratch_operands = 0 : i64, tpu.core_type = #tpu.core_type<tc>, window_params = [{transform_indices = @transform_0, window_bounds = array<i64: 1, 1, 32, 32>}, {pipeline_mode = #tpu.pipeline_mode<synchronous>, transform_indices = @transform_1, window_bounds = array<i64: 160, 168>}, {pipeline_mode = #tpu.pipeline_mode<synchronous>, transform_indices = @transform_2, window_bounds = array<i64: 1, 168>}, {pipeline_mode = #tpu.pipeline_mode<synchronous>, transform_indices = @transform_3, window_bounds = array<i64: 14, 28>}, {pipeline_mode = #tpu.pipeline_mode<synchronous>, transform_indices = @transform_4, window_bounds = array<i64: 168, 84>}, {pipeline_mode = #tpu.pipeline_mode<synchronous>, transform_indices = @transform_5, window_bounds = array<i64: 420, 160>}, {pipeline_mode = #tpu.pipeline_mode<synchronous>, transform_indices = @transform_6, window_bounds = array<i64: 1, 160>}, {pipeline_mode = #tpu.pipeline_mode<synchronous>, transform_indices = @transform_7, window_bounds = array<i64: 5, 10>}, {pipeline_mode = #tpu.pipeline_mode<synchronous>, transform_indices = @transform_8, window_bounds = array<i64: 160, 80>}, {pipeline_mode = #tpu.pipeline_mode<synchronous>, transform_indices = @transform_9, window_bounds = array<i64: 400, 120>}, {pipeline_mode = #tpu.pipeline_mode<synchronous>, transform_indices = @transform_10, window_bounds = array<i64: 1, 120>}, {pipeline_mode = #tpu.pipeline_mode<synchronous>, transform_indices = @transform_11, window_bounds = array<i64: 120, 84>}, {pipeline_mode = #tpu.pipeline_mode<synchronous>, transform_indices = @transform_12, window_bounds = array<i64: 1, 84>}, {pipeline_mode = #tpu.pipeline_mode<synchronous>, transform_indices = @transform_13, window_bounds = array<i64: 84, 10>}, {pipeline_mode = #tpu.pipeline_mode<synchronous>, transform_indices = @transform_14, window_bounds = array<i64: 1, 10>}, {transform_indices = @transform_15, window_bounds = array<i64: 1, 1, 10>}]} {
    %c0 = arith.constant 0 : index
    %c0_0 = arith.constant 0 : index
    %c0_1 = arith.constant 0 : index
    %c0_2 = arith.constant 0 : index
    %0 = vector.load %arg1[%c0, %c0_0, %c0_1, %c0_2] : memref<1x1x32x32xf32, #tpu.memory_space<vmem>>, vector<1x1x32x32xf32>
    %1 = vector.shape_cast %0 : vector<1x1x32x32xf32> to vector<32x32xf32>
    %2 = vector.extract_strided_slice %1 {offsets = [0, 0], sizes = [28, 32], strides = [1, 1]} : vector<32x32xf32> to vector<28x32xf32>
    %3 = vector.extract_strided_slice %1 {offsets = [1, 0], sizes = [28, 32], strides = [1, 1]} : vector<32x32xf32> to vector<28x32xf32>
    %4 = vector.extract_strided_slice %1 {offsets = [2, 0], sizes = [28, 32], strides = [1, 1]} : vector<32x32xf32> to vector<28x32xf32>
    %5 = vector.extract_strided_slice %1 {offsets = [3, 0], sizes = [28, 32], strides = [1, 1]} : vector<32x32xf32> to vector<28x32xf32>
    %6 = vector.extract_strided_slice %1 {offsets = [4, 0], sizes = [28, 32], strides = [1, 1]} : vector<32x32xf32> to vector<28x32xf32>
    %7 = tpu.concatenate %2, %3, %4, %5, %6 in 1 : vector<28x32xf32>, vector<28x32xf32>, vector<28x32xf32>, vector<28x32xf32>, vector<28x32xf32> -> vector<28x160xf32>
    %c0_3 = arith.constant 0 : index
    %c0_4 = arith.constant 0 : index
    %8 = vector.load %arg2[%c0_3, %c0_4] : memref<160x168xf32, #tpu.memory_space<vmem>>, vector<160x168xf32>
    %cst = arith.constant dense<0.000000e+00> : vector<28x168xf32>
    %9 = tpu.matmul %7, %8, %cst {dimension_numbers = #tpu.dot_dimension_numbers<[1], [0], [0], [1], [0, 0, 1, 1], [], []>} : vector<28x160xf32>, vector<160x168xf32>, vector<28x168xf32> -> vector<28x168xf32>
    %c0_5 = arith.constant 0 : index
    %c0_6 = arith.constant 0 : index
    %10 = vector.load %arg3[%c0_5, %c0_6] : memref<1x168xf32, #tpu.memory_space<vmem>>, vector<1x168xf32>
    %11 = vector.broadcast %10 : vector<1x168xf32> to vector<28x168xf32>
    %12 = arith.addf %9, %11 : vector<28x168xf32>
    %cst_7 = arith.constant 0.000000e+00 : f32
    %13 = vector.broadcast %cst_7 : f32 to vector<28x168xf32>
    %14 = arith.subf %13, %12 : vector<28x168xf32>
    %15 = math.exp %14 : vector<28x168xf32>
    %cst_8 = arith.constant 1.000000e+00 : f32
    %16 = vector.broadcast %cst_8 : f32 to vector<28x168xf32>
    %17 = arith.addf %16, %15 : vector<28x168xf32>
    %cst_9 = arith.constant 1.000000e+00 : f32
    %18 = vector.broadcast %cst_9 : f32 to vector<28x168xf32>
    %19 = arith.divf %18, %17 : vector<28x168xf32>
    %c0_10 = arith.constant 0 : index
    %c0_11 = arith.constant 0 : index
    %20 = vector.load %arg4[%c0_10, %c0_11] : memref<14x28xf32, #tpu.memory_space<vmem>>, vector<14x28xf32>
    %cst_12 = arith.constant dense<0.000000e+00> : vector<14x168xf32>
    %21 = tpu.matmul %20, %19, %cst_12 {dimension_numbers = #tpu.dot_dimension_numbers<[1], [0], [0], [1], [0, 0, 1, 1], [], []>} : vector<14x28xf32>, vector<28x168xf32>, vector<14x168xf32> -> vector<14x168xf32>
    %c0_13 = arith.constant 0 : index
    %c0_14 = arith.constant 0 : index
    %22 = vector.load %arg5[%c0_13, %c0_14] : memref<168x84xf32, #tpu.memory_space<vmem>>, vector<168x84xf32>
    %cst_15 = arith.constant dense<0.000000e+00> : vector<14x84xf32>
    %23 = tpu.matmul %21, %22, %cst_15 {dimension_numbers = #tpu.dot_dimension_numbers<[1], [0], [0], [1], [0, 0, 1, 1], [], []>} : vector<14x168xf32>, vector<168x84xf32>, vector<14x84xf32> -> vector<14x84xf32>
    %24 = vector.extract_strided_slice %23 {offsets = [0, 0], sizes = [10, 14], strides = [1, 1]} : vector<14x84xf32> to vector<10x14xf32>
    %25 = vector.extract_strided_slice %23 {offsets = [1, 0], sizes = [10, 14], strides = [1, 1]} : vector<14x84xf32> to vector<10x14xf32>
    %26 = vector.extract_strided_slice %23 {offsets = [2, 0], sizes = [10, 14], strides = [1, 1]} : vector<14x84xf32> to vector<10x14xf32>
    %27 = vector.extract_strided_slice %23 {offsets = [3, 0], sizes = [10, 14], strides = [1, 1]} : vector<14x84xf32> to vector<10x14xf32>
    %28 = vector.extract_strided_slice %23 {offsets = [4, 0], sizes = [10, 14], strides = [1, 1]} : vector<14x84xf32> to vector<10x14xf32>
    %29 = vector.extract_strided_slice %23 {offsets = [0, 14], sizes = [10, 14], strides = [1, 1]} : vector<14x84xf32> to vector<10x14xf32>
    %30 = vector.extract_strided_slice %23 {offsets = [1, 14], sizes = [10, 14], strides = [1, 1]} : vector<14x84xf32> to vector<10x14xf32>
    %31 = vector.extract_strided_slice %23 {offsets = [2, 14], sizes = [10, 14], strides = [1, 1]} : vector<14x84xf32> to vector<10x14xf32>
    %32 = vector.extract_strided_slice %23 {offsets = [3, 14], sizes = [10, 14], strides = [1, 1]} : vector<14x84xf32> to vector<10x14xf32>
    %33 = vector.extract_strided_slice %23 {offsets = [4, 14], sizes = [10, 14], strides = [1, 1]} : vector<14x84xf32> to vector<10x14xf32>
    %34 = vector.extract_strided_slice %23 {offsets = [0, 28], sizes = [10, 14], strides = [1, 1]} : vector<14x84xf32> to vector<10x14xf32>
    %35 = vector.extract_strided_slice %23 {offsets = [1, 28], sizes = [10, 14], strides = [1, 1]} : vector<14x84xf32> to vector<10x14xf32>
    %36 = vector.extract_strided_slice %23 {offsets = [2, 28], sizes = [10, 14], strides = [1, 1]} : vector<14x84xf32> to vector<10x14xf32>
    %37 = vector.extract_strided_slice %23 {offsets = [3, 28], sizes = [10, 14], strides = [1, 1]} : vector<14x84xf32> to vector<10x14xf32>
    %38 = vector.extract_strided_slice %23 {offsets = [4, 28], sizes = [10, 14], strides = [1, 1]} : vector<14x84xf32> to vector<10x14xf32>
    %39 = vector.extract_strided_slice %23 {offsets = [0, 42], sizes = [10, 14], strides = [1, 1]} : vector<14x84xf32> to vector<10x14xf32>
    %40 = vector.extract_strided_slice %23 {offsets = [1, 42], sizes = [10, 14], strides = [1, 1]} : vector<14x84xf32> to vector<10x14xf32>
    %41 = vector.extract_strided_slice %23 {offsets = [2, 42], sizes = [10, 14], strides = [1, 1]} : vector<14x84xf32> to vector<10x14xf32>
    %42 = vector.extract_strided_slice %23 {offsets = [3, 42], sizes = [10, 14], strides = [1, 1]} : vector<14x84xf32> to vector<10x14xf32>
    %43 = vector.extract_strided_slice %23 {offsets = [4, 42], sizes = [10, 14], strides = [1, 1]} : vector<14x84xf32> to vector<10x14xf32>
    %44 = vector.extract_strided_slice %23 {offsets = [0, 56], sizes = [10, 14], strides = [1, 1]} : vector<14x84xf32> to vector<10x14xf32>
    %45 = vector.extract_strided_slice %23 {offsets = [1, 56], sizes = [10, 14], strides = [1, 1]} : vector<14x84xf32> to vector<10x14xf32>
    %46 = vector.extract_strided_slice %23 {offsets = [2, 56], sizes = [10, 14], strides = [1, 1]} : vector<14x84xf32> to vector<10x14xf32>
    %47 = vector.extract_strided_slice %23 {offsets = [3, 56], sizes = [10, 14], strides = [1, 1]} : vector<14x84xf32> to vector<10x14xf32>
    %48 = vector.extract_strided_slice %23 {offsets = [4, 56], sizes = [10, 14], strides = [1, 1]} : vector<14x84xf32> to vector<10x14xf32>
    %49 = vector.extract_strided_slice %23 {offsets = [0, 70], sizes = [10, 14], strides = [1, 1]} : vector<14x84xf32> to vector<10x14xf32>
    %50 = vector.extract_strided_slice %23 {offsets = [1, 70], sizes = [10, 14], strides = [1, 1]} : vector<14x84xf32> to vector<10x14xf32>
    %51 = vector.extract_strided_slice %23 {offsets = [2, 70], sizes = [10, 14], strides = [1, 1]} : vector<14x84xf32> to vector<10x14xf32>
    %52 = vector.extract_strided_slice %23 {offsets = [3, 70], sizes = [10, 14], strides = [1, 1]} : vector<14x84xf32> to vector<10x14xf32>
    %53 = vector.extract_strided_slice %23 {offsets = [4, 70], sizes = [10, 14], strides = [1, 1]} : vector<14x84xf32> to vector<10x14xf32>
    %54 = tpu.concatenate %24, %25, %26, %27, %28, %29, %30, %31, %32, %33, %34, %35, %36, %37, %38, %39 in 1 : vector<10x14xf32>, vector<10x14xf32>, vector<10x14xf32>, vector<10x14xf32>, vector<10x14xf32>, vector<10x14xf32>, vector<10x14xf32>, vector<10x14xf32>, vector<10x14xf32>, vector<10x14xf32>, vector<10x14xf32>, vector<10x14xf32>, vector<10x14xf32>, vector<10x14xf32>, vector<10x14xf32>, vector<10x14xf32> -> vector<10x224xf32>
    %55 = tpu.concatenate %40, %41, %42, %43, %44, %45, %46, %47, %48, %49, %50, %51, %52, %53 in 1 : vector<10x14xf32>, vector<10x14xf32>, vector<10x14xf32>, vector<10x14xf32>, vector<10x14xf32>, vector<10x14xf32>, vector<10x14xf32>, vector<10x14xf32>, vector<10x14xf32>, vector<10x14xf32>, vector<10x14xf32>, vector<10x14xf32>, vector<10x14xf32>, vector<10x14xf32> -> vector<10x196xf32>
    %56 = tpu.concatenate %54, %55 in 1 : vector<10x224xf32>, vector<10x196xf32> -> vector<10x420xf32>
    %c0_16 = arith.constant 0 : index
    %c0_17 = arith.constant 0 : index
    %57 = vector.load %arg6[%c0_16, %c0_17] : memref<420x160xf32, #tpu.memory_space<vmem>>, vector<420x160xf32>
    %cst_18 = arith.constant dense<0.000000e+00> : vector<10x160xf32>
    %58 = tpu.matmul %56, %57, %cst_18 {dimension_numbers = #tpu.dot_dimension_numbers<[1], [0], [0], [1], [0, 0, 1, 1], [], []>} : vector<10x420xf32>, vector<420x160xf32>, vector<10x160xf32> -> vector<10x160xf32>
    %c0_19 = arith.constant 0 : index
    %c0_20 = arith.constant 0 : index
    %59 = vector.load %arg7[%c0_19, %c0_20] : memref<1x160xf32, #tpu.memory_space<vmem>>, vector<1x160xf32>
    %60 = vector.broadcast %59 : vector<1x160xf32> to vector<10x160xf32>
    %61 = arith.addf %58, %60 : vector<10x160xf32>
    %cst_21 = arith.constant 0.000000e+00 : f32
    %62 = vector.broadcast %cst_21 : f32 to vector<10x160xf32>
    %63 = arith.subf %62, %61 : vector<10x160xf32>
    %64 = math.exp %63 : vector<10x160xf32>
    %cst_22 = arith.constant 1.000000e+00 : f32
    %65 = vector.broadcast %cst_22 : f32 to vector<10x160xf32>
    %66 = arith.addf %65, %64 : vector<10x160xf32>
    %cst_23 = arith.constant 1.000000e+00 : f32
    %67 = vector.broadcast %cst_23 : f32 to vector<10x160xf32>
    %68 = arith.divf %67, %66 : vector<10x160xf32>
    %c0_24 = arith.constant 0 : index
    %c0_25 = arith.constant 0 : index
    %69 = vector.load %arg8[%c0_24, %c0_25] : memref<5x10xf32, #tpu.memory_space<vmem>>, vector<5x10xf32>
    %cst_26 = arith.constant dense<0.000000e+00> : vector<5x160xf32>
    %70 = tpu.matmul %69, %68, %cst_26 {dimension_numbers = #tpu.dot_dimension_numbers<[1], [0], [0], [1], [0, 0, 1, 1], [], []>} : vector<5x10xf32>, vector<10x160xf32>, vector<5x160xf32> -> vector<5x160xf32>
    %c0_27 = arith.constant 0 : index
    %c0_28 = arith.constant 0 : index
    %71 = vector.load %arg9[%c0_27, %c0_28] : memref<160x80xf32, #tpu.memory_space<vmem>>, vector<160x80xf32>
    %cst_29 = arith.constant dense<0.000000e+00> : vector<5x80xf32>
    %72 = tpu.matmul %70, %71, %cst_29 {dimension_numbers = #tpu.dot_dimension_numbers<[1], [0], [0], [1], [0, 0, 1, 1], [], []>} : vector<5x160xf32>, vector<160x80xf32>, vector<5x80xf32> -> vector<5x80xf32>
    %73 = vector.extract_strided_slice %72 {offsets = [0, 0], sizes = [1, 80], strides = [1, 1]} : vector<5x80xf32> to vector<1x80xf32>
    %74 = vector.extract_strided_slice %72 {offsets = [1, 0], sizes = [1, 80], strides = [1, 1]} : vector<5x80xf32> to vector<1x80xf32>
    %75 = vector.extract_strided_slice %72 {offsets = [2, 0], sizes = [1, 80], strides = [1, 1]} : vector<5x80xf32> to vector<1x80xf32>
    %76 = vector.extract_strided_slice %72 {offsets = [3, 0], sizes = [1, 80], strides = [1, 1]} : vector<5x80xf32> to vector<1x80xf32>
    %77 = vector.extract_strided_slice %72 {offsets = [4, 0], sizes = [1, 80], strides = [1, 1]} : vector<5x80xf32> to vector<1x80xf32>
    %78 = tpu.concatenate %73, %74, %75, %76, %77 in 1 : vector<1x80xf32>, vector<1x80xf32>, vector<1x80xf32>, vector<1x80xf32>, vector<1x80xf32> -> vector<1x400xf32>
    %c0_30 = arith.constant 0 : index
    %c0_31 = arith.constant 0 : index
    %79 = vector.load %arg10[%c0_30, %c0_31] : memref<400x120xf32, #tpu.memory_space<vmem>>, vector<400x120xf32>
    %cst_32 = arith.constant dense<0.000000e+00> : vector<1x120xf32>
    %80 = tpu.matmul %78, %79, %cst_32 {dimension_numbers = #tpu.dot_dimension_numbers<[1], [0], [0], [1], [0, 0, 1, 1], [], []>} : vector<1x400xf32>, vector<400x120xf32>, vector<1x120xf32> -> vector<1x120xf32>
    %c0_33 = arith.constant 0 : index
    %c0_34 = arith.constant 0 : index
    %81 = vector.load %arg11[%c0_33, %c0_34] : memref<1x120xf32, #tpu.memory_space<vmem>>, vector<1x120xf32>
    %82 = arith.addf %80, %81 : vector<1x120xf32>
    %cst_35 = arith.constant 0.000000e+00 : f32
    %83 = vector.broadcast %cst_35 : f32 to vector<1x120xf32>
    %84 = arith.subf %83, %82 : vector<1x120xf32>
    %85 = math.exp %84 : vector<1x120xf32>
    %cst_36 = arith.constant 1.000000e+00 : f32
    %86 = vector.broadcast %cst_36 : f32 to vector<1x120xf32>
    %87 = arith.addf %86, %85 : vector<1x120xf32>
    %cst_37 = arith.constant 1.000000e+00 : f32
    %88 = vector.broadcast %cst_37 : f32 to vector<1x120xf32>
    %89 = arith.divf %88, %87 : vector<1x120xf32>
    %c0_38 = arith.constant 0 : index
    %c0_39 = arith.constant 0 : index
    %90 = vector.load %arg12[%c0_38, %c0_39] : memref<120x84xf32, #tpu.memory_space<vmem>>, vector<120x84xf32>
    %cst_40 = arith.constant dense<0.000000e+00> : vector<1x84xf32>
    %91 = tpu.matmul %89, %90, %cst_40 {dimension_numbers = #tpu.dot_dimension_numbers<[1], [0], [0], [1], [0, 0, 1, 1], [], []>} : vector<1x120xf32>, vector<120x84xf32>, vector<1x84xf32> -> vector<1x84xf32>
    %c0_41 = arith.constant 0 : index
    %c0_42 = arith.constant 0 : index
    %92 = vector.load %arg13[%c0_41, %c0_42] : memref<1x84xf32, #tpu.memory_space<vmem>>, vector<1x84xf32>
    %93 = arith.addf %91, %92 : vector<1x84xf32>
    %cst_43 = arith.constant 0.000000e+00 : f32
    %94 = vector.broadcast %cst_43 : f32 to vector<1x84xf32>
    %95 = arith.subf %94, %93 : vector<1x84xf32>
    %96 = math.exp %95 : vector<1x84xf32>
    %cst_44 = arith.constant 1.000000e+00 : f32
    %97 = vector.broadcast %cst_44 : f32 to vector<1x84xf32>
    %98 = arith.addf %97, %96 : vector<1x84xf32>
    %cst_45 = arith.constant 1.000000e+00 : f32
    %99 = vector.broadcast %cst_45 : f32 to vector<1x84xf32>
    %100 = arith.divf %99, %98 : vector<1x84xf32>
    %c0_46 = arith.constant 0 : index
    %c0_47 = arith.constant 0 : index
    %101 = vector.load %arg14[%c0_46, %c0_47] : memref<84x10xf32, #tpu.memory_space<vmem>>, vector<84x10xf32>
    %cst_48 = arith.constant dense<0.000000e+00> : vector<1x10xf32>
    %102 = tpu.matmul %100, %101, %cst_48 {dimension_numbers = #tpu.dot_dimension_numbers<[1], [0], [0], [1], [0, 0, 1, 1], [], []>} : vector<1x84xf32>, vector<84x10xf32>, vector<1x10xf32> -> vector<1x10xf32>
    %c0_49 = arith.constant 0 : index
    %c0_50 = arith.constant 0 : index
    %103 = vector.load %arg15[%c0_49, %c0_50] : memref<1x10xf32, #tpu.memory_space<vmem>>, vector<1x10xf32>
    %104 = arith.addf %102, %103 : vector<1x10xf32>
    %105 = vector.shape_cast %104 : vector<1x10xf32> to vector<1x1x10xf32>
    %c0_51 = arith.constant 0 : index
    %c0_52 = arith.constant 0 : index
    %c0_53 = arith.constant 0 : index
    %106 = vector.load %arg16[%c0_51, %c0_52, %c0_53] : memref<1x1x10xf32, #tpu.memory_space<vmem>>, vector<1x1x10xf32>
    tpu.vector_store %arg16[%c0_51, %c0_52, %c0_53], %105 {strides = array<i32>} : memref<1x1x10xf32, #tpu.memory_space<vmem>>, vector<1x1x10xf32>,
    return
  }
  func.func @transform_0(%arg0: i32) -> (i32, i32, i32, i32) {
    %c0_i32 = arith.constant 0 : i32
    %c0_i32_0 = arith.constant 0 : i32
    %c0_i32_1 = arith.constant 0 : i32
    %c0_i32_2 = arith.constant 0 : i32
    return %arg0, %c0_i32, %c0_i32_0, %c0_i32_1 : i32, i32, i32, i32
  }
  func.func @transform_1(%arg0: i32) -> (i32, i32) {
    %c0_i32 = arith.constant 0 : i32
    %c0_i32_0 = arith.constant 0 : i32
    %c0_i32_1 = arith.constant 0 : i32
    return %c0_i32, %c0_i32_0 : i32, i32
  }
  func.func @transform_2(%arg0: i32) -> (i32, i32) {
    %c0_i32 = arith.constant 0 : i32
    %c0_i32_0 = arith.constant 0 : i32
    %c0_i32_1 = arith.constant 0 : i32
    return %c0_i32, %c0_i32_0 : i32, i32
  }
  func.func @transform_3(%arg0: i32) -> (i32, i32) {
    %c0_i32 = arith.constant 0 : i32
    %c0_i32_0 = arith.constant 0 : i32
    %c0_i32_1 = arith.constant 0 : i32
    return %c0_i32, %c0_i32_0 : i32, i32
  }
  func.func @transform_4(%arg0: i32) -> (i32, i32) {
    %c0_i32 = arith.constant 0 : i32
    %c0_i32_0 = arith.constant 0 : i32
    %c0_i32_1 = arith.constant 0 : i32
    return %c0_i32, %c0_i32_0 : i32, i32
  }
  func.func @transform_5(%arg0: i32) -> (i32, i32) {
    %c0_i32 = arith.constant 0 : i32
    %c0_i32_0 = arith.constant 0 : i32
    %c0_i32_1 = arith.constant 0 : i32
    return %c0_i32, %c0_i32_0 : i32, i32
  }
  func.func @transform_6(%arg0: i32) -> (i32, i32) {
    %c0_i32 = arith.constant 0 : i32
    %c0_i32_0 = arith.constant 0 : i32
    %c0_i32_1 = arith.constant 0 : i32
    return %c0_i32, %c0_i32_0 : i32, i32
  }
  func.func @transform_7(%arg0: i32) -> (i32, i32) {
    %c0_i32 = arith.constant 0 : i32
    %c0_i32_0 = arith.constant 0 : i32
    %c0_i32_1 = arith.constant 0 : i32
    return %c0_i32, %c0_i32_0 : i32, i32
  }
  func.func @transform_8(%arg0: i32) -> (i32, i32) {
    %c0_i32 = arith.constant 0 : i32
    %c0_i32_0 = arith.constant 0 : i32
    %c0_i32_1 = arith.constant 0 : i32
    return %c0_i32, %c0_i32_0 : i32, i32
  }
  func.func @transform_9(%arg0: i32) -> (i32, i32) {
    %c0_i32 = arith.constant 0 : i32
    %c0_i32_0 = arith.constant 0 : i32
    %c0_i32_1 = arith.constant 0 : i32
    return %c0_i32, %c0_i32_0 : i32, i32
  }
  func.func @transform_10(%arg0: i32) -> (i32, i32) {
    %c0_i32 = arith.constant 0 : i32
    %c0_i32_0 = arith.constant 0 : i32
    %c0_i32_1 = arith.constant 0 : i32
    return %c0_i32, %c0_i32_0 : i32, i32
  }
  func.func @transform_11(%arg0: i32) -> (i32, i32) {
    %c0_i32 = arith.constant 0 : i32
    %c0_i32_0 = arith.constant 0 : i32
    %c0_i32_1 = arith.constant 0 : i32
    return %c0_i32, %c0_i32_0 : i32, i32
  }
  func.func @transform_12(%arg0: i32) -> (i32, i32) {
    %c0_i32 = arith.constant 0 : i32
    %c0_i32_0 = arith.constant 0 : i32
    %c0_i32_1 = arith.constant 0 : i32
    return %c0_i32, %c0_i32_0 : i32, i32
  }
  func.func @transform_13(%arg0: i32) -> (i32, i32) {
    %c0_i32 = arith.constant 0 : i32
    %c0_i32_0 = arith.constant 0 : i32
    %c0_i32_1 = arith.constant 0 : i32
    return %c0_i32, %c0_i32_0 : i32, i32
  }
  func.func @transform_14(%arg0: i32) -> (i32, i32) {
    %c0_i32 = arith.constant 0 : i32
    %c0_i32_0 = arith.constant 0 : i32
    %c0_i32_1 = arith.constant 0 : i32
    return %c0_i32, %c0_i32_0 : i32, i32
  }
  func.func @transform_15(%arg0: i32) -> (i32, i32, i32) {
    %c0_i32 = arith.constant 0 : i32
    %c0_i32_0 = arith.constant 0 : i32
    %c0_i32_1 = arith.constant 0 : i32
    return %arg0, %c0_i32, %c0_i32_0 : i32, i32, i32
  }
}

</mosaic_0001>

<llo_original>
// kernel: forward.1
$region0: #{forward.1}
  #allocation0 [shape = 'u32[]', space=smem, size = 0x4, offset = 0x4, fixed_abs, tag = 'smem constant byte address 0x4 - core index']
  #allocation1 [shape = 'u32[144,128]{1,0:T(1,128)}', space=vmem, size = 0x12000, scoped, tag = 'internal scratch']
  %s0 = inlined_call_operand.vmem [shape: f32[2,1,32,32], index: 0, kind: input, shape index: {}]
  %s1 = inlined_call_operand.vmem [shape: f32[160,168], index: 1, kind: input, shape index: {}]
  %s2 = inlined_call_operand.vmem [shape: f32[1,168], index: 2, kind: input, shape index: {}]
  %s3 = inlined_call_operand.vmem [shape: f32[14,28], index: 3, kind: input, shape index: {}]
  %s4 = inlined_call_operand.vmem [shape: f32[168,84], index: 4, kind: input, shape index: {}]
  %s5 = inlined_call_operand.vmem [shape: f32[420,160], index: 5, kind: input, shape index: {}]
  %s6 = inlined_call_operand.vmem [shape: f32[1,160], index: 6, kind: input, shape index: {}]
  %s7 = inlined_call_operand.vmem [shape: f32[5,10], index: 7, kind: input, shape index: {}]
  %s8 = inlined_call_operand.vmem [shape: f32[160,80], index: 8, kind: input, shape index: {}]
  %s9 = inlined_call_operand.vmem [shape: f32[400,120], index: 9, kind: input, shape index: {}]
  %s10 = inlined_call_operand.vmem [shape: f32[1,120], index: 10, kind: input, shape index: {}]
  %s11 = inlined_call_operand.vmem [shape: f32[120,84], index: 11, kind: input, shape index: {}]
  %s12 = inlined_call_operand.vmem [shape: f32[1,84], index: 12, kind: input, shape index: {}]
  %s13 = inlined_call_operand.vmem [shape: f32[84,10], index: 13, kind: input, shape index: {}]
  %s14 = inlined_call_operand.vmem [shape: f32[1,10], index: 14, kind: input, shape index: {}]
  %s15 = inlined_call_operand.hbm [shape: f32[2,1,10], index: 15, kind: output, shape index: {}]
  %s16 = sld [smem:[#allocation0]]
  $region93: #{forward.1} parent=0
    _
  %s18 = ssub.s32 1, %s16
  %s19 = scalar_select 0, %s18, %s16
  $region1: #{forward.1} parent=0
    #allocation2 [shape = 'u8[1024]{0}', space=vmem, size = 0x400, scoped, tag = 'output window, operand 0']
    #allocation3 [shape = 's32[2]{0}', space=sflag, size = 0x8, scoped, tag = 'scoped memory for forward.1']
    %20 = vsyncpa [#allocation3], 0
    %s21 = scalar_lea.sflag [#allocation3], 1
    %22 = vsyncpa %s21, 0
    loop: start=0, step=1, limit=4
    $region2: #{forward.1} parent=1 // loop_pre_header
      _
    $region3: #{forward.1} parent=1 // loop_header
      %s24 = sphi 0, %s28
      %p25 = scmp.ge.s32.totalorder %s24, 4
      %s34 = sphi 0, %s36
      %s37 = sphi 0, %s34
      %s38 = sphi 0, %s37
      %s54 = sphi 0, %s38
      %s58 = sphi 0, %s58
      %s60 = sphi 0, %s58
      %s61 = sphi 0, %s60
      %s75 = sphi 0, %s61
      %s79 = sphi 0, %s79
      %s81 = sphi 0, %s79
      %s82 = sphi 0, %s81
      %s96 = sphi 0, %s82
      %s100 = sphi 0, %s100
      %s102 = sphi 0, %s100
      %s103 = sphi 0, %s102
      %s117 = sphi 0, %s103
      %s121 = sphi 0, %s121
      %s123 = sphi 0, %s121
      %s124 = sphi 0, %s123
      %s138 = sphi 0, %s124
      %s142 = sphi 0, %s142
      %s144 = sphi 0, %s142
      %s145 = sphi 0, %s144
      %s159 = sphi 0, %s145
      %s163 = sphi 0, %s163
      %s165 = sphi 0, %s163
      %s166 = sphi 0, %s165
      %s180 = sphi 0, %s166
      %s184 = sphi 0, %s184
      %s186 = sphi 0, %s184
      %s187 = sphi 0, %s186
      %s201 = sphi 0, %s187
      %s205 = sphi 0, %s205
      %s207 = sphi 0, %s205
      %s208 = sphi 0, %s207
      %s222 = sphi 0, %s208
      %s226 = sphi 0, %s226
      %s228 = sphi 0, %s226
      %s229 = sphi 0, %s228
      %s243 = sphi 0, %s229
      %s247 = sphi 0, %s247
      %s249 = sphi 0, %s247
      %s250 = sphi 0, %s249
      %s264 = sphi 0, %s250
      %s268 = sphi 0, %s268
      %s270 = sphi 0, %s268
      %s271 = sphi 0, %s270
      %s285 = sphi 0, %s271
      %s289 = sphi 0, %s289
      %s291 = sphi 0, %s289
      %s292 = sphi 0, %s291
      %s306 = sphi 0, %s292
      %s310 = sphi 0, %s310
      %s312 = sphi 0, %s310
      %s313 = sphi 0, %s312
      %s327 = sphi 0, %s313
      %s331 = sphi 0, %s331
      %s333 = sphi 0, %s331
      %s334 = sphi 0, %s333
      %s348 = sphi 0, %s334
      %s354 = sphi 0, %s356
      %s357 = sphi 0, %s354
      %s358 = sphi 0, %s357
      %s374 = sphi 0, %s358
    $region4: #{forward.1} parent=1 // loop_header_branch
      %27 = sbr.rel (%p25) target = $region8
    $region5: #{forward.1} parent=1 // loop_body
      %s29 = ssub.s32 %s24, 1
      %s30 = ssub.s32 %s24, 2
      %s31 = sadd.s32 %s24, 1
      %s32 = ssub.s32 %s24, %s31
      %p33 = scmp.eq.s32.totalorder %s32, 0
      %s35 = sadd.s32 %s34, 1
      %s36 = scalar_select %p33, %s34, %s35
      %p39 = pneg %p33
      %p40 = scmp.eq.s32.totalorder %s24, 1
      %p41 = por %p39, %p40
      %p42 = scmp.ne.s32.totalorder %s34, %s37
      %p43 = scmp.eq.s32.totalorder %s24, 0
      %p44 = por %p42, %p43
      %p45 = scmp.ne.s32.totalorder %s34, %s37
      %p46 = scmp.eq.s32.totalorder %s29, 1
      %p47 = por %p45, %p46
      %p48 = scmp.ne.s32.totalorder %s37, %s38
      %p49 = scmp.eq.s32.totalorder %s29, 0
      %p50 = por %p48, %p49
      %p51 = scmp.ne.s32.totalorder %s37, %s38
      %p52 = scmp.eq.s32.totalorder %s30, 1
      %p53 = por %p51, %p52
      %p55 = scmp.ne.s32.totalorder %s38, %s54
      %p56 = scmp.eq.s32.totalorder %s30, 0
      %p57 = por %p55, %p56
      %s59 = sadd.s32 %s58, 1
      %p62 = scmp.eq.s32.totalorder %s24, 1
      %p63 = scmp.ne.s32.totalorder %s58, %s60
      %p64 = scmp.eq.s32.totalorder %s24, 0
      %p65 = por %p63, %p64
      %p66 = scmp.ne.s32.totalorder %s58, %s60
      %p67 = scmp.eq.s32.totalorder %s29, 1
      %p68 = por %p66, %p67
      %p69 = scmp.ne.s32.totalorder %s60, %s61
      %p70 = scmp.eq.s32.totalorder %s29, 0
      %p71 = por %p69, %p70
      %p72 = scmp.ne.s32.totalorder %s60, %s61
      %p73 = scmp.eq.s32.totalorder %s30, 1
      %p74 = por %p72, %p73
      %p76 = scmp.ne.s32.totalorder %s61, %s75
      %p77 = scmp.eq.s32.totalorder %s30, 0
      %p78 = por %p76, %p77
      %s80 = sadd.s32 %s79, 1
      %p83 = scmp.eq.s32.totalorder %s24, 1
      %p84 = scmp.ne.s32.totalorder %s79, %s81
      %p85 = scmp.eq.s32.totalorder %s24, 0
      %p86 = por %p84, %p85
      %p87 = scmp.ne.s32.totalorder %s79, %s81
      %p88 = scmp.eq.s32.totalorder %s29, 1
      %p89 = por %p87, %p88
      %p90 = scmp.ne.s32.totalorder %s81, %s82
      %p91 = scmp.eq.s32.totalorder %s29, 0
      %p92 = por %p90, %p91
      %p93 = scmp.ne.s32.totalorder %s81, %s82
      %p94 = scmp.eq.s32.totalorder %s30, 1
      %p95 = por %p93, %p94
      %p97 = scmp.ne.s32.totalorder %s82, %s96
      %p98 = scmp.eq.s32.totalorder %s30, 0
      %p99 = por %p97, %p98
      %s101 = sadd.s32 %s100, 1
      %p104 = scmp.eq.s32.totalorder %s24, 1
      %p105 = scmp.ne.s32.totalorder %s100, %s102
      %p106 = scmp.eq.s32.totalorder %s24, 0
      %p107 = por %p105, %p106
      %p108 = scmp.ne.s32.totalorder %s100, %s102
      %p109 = scmp.eq.s32.totalorder %s29, 1
      %p110 = por %p108, %p109
      %p111 = scmp.ne.s32.totalorder %s102, %s103
      %p112 = scmp.eq.s32.totalorder %s29, 0
      %p113 = por %p111, %p112
      %p114 = scmp.ne.s32.totalorder %s102, %s103
      %p115 = scmp.eq.s32.totalorder %s30, 1
      %p116 = por %p114, %p115
      %p118 = scmp.ne.s32.totalorder %s103, %s117
      %p119 = scmp.eq.s32.totalorder %s30, 0
      %p120 = por %p118, %p119
      %s122 = sadd.s32 %s121, 1
      %p125 = scmp.eq.s32.totalorder %s24, 1
      %p126 = scmp.ne.s32.totalorder %s121, %s123
      %p127 = scmp.eq.s32.totalorder %s24, 0
      %p128 = por %p126, %p127
      %p129 = scmp.ne.s32.totalorder %s121, %s123
      %p130 = scmp.eq.s32.totalorder %s29, 1
      %p131 = por %p129, %p130
      %p132 = scmp.ne.s32.totalorder %s123, %s124
      %p133 = scmp.eq.s32.totalorder %s29, 0
      %p134 = por %p132, %p133
      %p135 = scmp.ne.s32.totalorder %s123, %s124
      %p136 = scmp.eq.s32.totalorder %s30, 1
      %p137 = por %p135, %p136
      %p139 = scmp.ne.s32.totalorder %s124, %s138
      %p140 = scmp.eq.s32.totalorder %s30, 0
      %p141 = por %p139, %p140
      %s143 = sadd.s32 %s142, 1
      %p146 = scmp.eq.s32.totalorder %s24, 1
      %p147 = scmp.ne.s32.totalorder %s142, %s144
      %p148 = scmp.eq.s32.totalorder %s24, 0
      %p149 = por %p147, %p148
      %p150 = scmp.ne.s32.totalorder %s142, %s144
      %p151 = scmp.eq.s32.totalorder %s29, 1
      %p152 = por %p150, %p151
      %p153 = scmp.ne.s32.totalorder %s144, %s145
      %p154 = scmp.eq.s32.totalorder %s29, 0
      %p155 = por %p153, %p154
      %p156 = scmp.ne.s32.totalorder %s144, %s145
      %p157 = scmp.eq.s32.totalorder %s30, 1
      %p158 = por %p156, %p157
      %p160 = scmp.ne.s32.totalorder %s145, %s159
      %p161 = scmp.eq.s32.totalorder %s30, 0
      %p162 = por %p160, %p161
      %s164 = sadd.s32 %s163, 1
      %p167 = scmp.eq.s32.totalorder %s24, 1
      %p168 = scmp.ne.s32.totalorder %s163, %s165
      %p169 = scmp.eq.s32.totalorder %s24, 0
      %p170 = por %p168, %p169
      %p171 = scmp.ne.s32.totalorder %s163, %s165
      %p172 = scmp.eq.s32.totalorder %s29, 1
      %p173 = por %p171, %p172
      %p174 = scmp.ne.s32.totalorder %s165, %s166
      %p175 = scmp.eq.s32.totalorder %s29, 0
      %p176 = por %p174, %p175
      %p177 = scmp.ne.s32.totalorder %s165, %s166
      %p178 = scmp.eq.s32.totalorder %s30, 1
      %p179 = por %p177, %p178
      %p181 = scmp.ne.s32.totalorder %s166, %s180
      %p182 = scmp.eq.s32.totalorder %s30, 0
      %p183 = por %p181, %p182
      %s185 = sadd.s32 %s184, 1
      %p188 = scmp.eq.s32.totalorder %s24, 1
      %p189 = scmp.ne.s32.totalorder %s184, %s186
      %p190 = scmp.eq.s32.totalorder %s24, 0
      %p191 = por %p189, %p190
      %p192 = scmp.ne.s32.totalorder %s184, %s186
      %p193 = scmp.eq.s32.totalorder %s29, 1
      %p194 = por %p192, %p193
      %p195 = scmp.ne.s32.totalorder %s186, %s187
      %p196 = scmp.eq.s32.totalorder %s29, 0
      %p197 = por %p195, %p196
      %p198 = scmp.ne.s32.totalorder %s186, %s187
      %p199 = scmp.eq.s32.totalorder %s30, 1
      %p200 = por %p198, %p199
      %p202 = scmp.ne.s32.totalorder %s187, %s201
      %p203 = scmp.eq.s32.totalorder %s30, 0
      %p204 = por %p202, %p203
      %s206 = sadd.s32 %s205, 1
      %p209 = scmp.eq.s32.totalorder %s24, 1
      %p210 = scmp.ne.s32.totalorder %s205, %s207
      %p211 = scmp.eq.s32.totalorder %s24, 0
      %p212 = por %p210, %p211
      %p213 = scmp.ne.s32.totalorder %s205, %s207
      %p214 = scmp.eq.s32.totalorder %s29, 1
      %p215 = por %p213, %p214
      %p216 = scmp.ne.s32.totalorder %s207, %s208
      %p217 = scmp.eq.s32.totalorder %s29, 0
      %p218 = por %p216, %p217
      %p219 = scmp.ne.s32.totalorder %s207, %s208
      %p220 = scmp.eq.s32.totalorder %s30, 1
      %p221 = por %p219, %p220
      %p223 = scmp.ne.s32.totalorder %s208, %s222
      %p224 = scmp.eq.s32.totalorder %s30, 0
      %p225 = por %p223, %p224
      %s227 = sadd.s32 %s226, 1
      %p230 = scmp.eq.s32.totalorder %s24, 1
      %p231 = scmp.ne.s32.totalorder %s226, %s228
      %p232 = scmp.eq.s32.totalorder %s24, 0
      %p233 = por %p231, %p232
      %p234 = scmp.ne.s32.totalorder %s226, %s228
      %p235 = scmp.eq.s32.totalorder %s29, 1
      %p236 = por %p234, %p235
      %p237 = scmp.ne.s32.totalorder %s228, %s229
      %p238 = scmp.eq.s32.totalorder %s29, 0
      %p239 = por %p237, %p238
      %p240 = scmp.ne.s32.totalorder %s228, %s229
      %p241 = scmp.eq.s32.totalorder %s30, 1
      %p242 = por %p240, %p241
      %p244 = scmp.ne.s32.totalorder %s229, %s243
      %p245 = scmp.eq.s32.totalorder %s30, 0
      %p246 = por %p244, %p245
      %s248 = sadd.s32 %s247, 1
      %p251 = scmp.eq.s32.totalorder %s24, 1
      %p252 = scmp.ne.s32.totalorder %s247, %s249
      %p253 = scmp.eq.s32.totalorder %s24, 0
      %p254 = por %p252, %p253
      %p255 = scmp.ne.s32.totalorder %s247, %s249
      %p256 = scmp.eq.s32.totalorder %s29, 1
      %p257 = por %p255, %p256
      %p258 = scmp.ne.s32.totalorder %s249, %s250
      %p259 = scmp.eq.s32.totalorder %s29, 0
      %p260 = por %p258, %p259
      %p261 = scmp.ne.s32.totalorder %s249, %s250
      %p262 = scmp.eq.s32.totalorder %s30, 1
      %p263 = por %p261, %p262
      %p265 = scmp.ne.s32.totalorder %s250, %s264
      %p266 = scmp.eq.s32.totalorder %s30, 0
      %p267 = por %p265, %p266
      %s269 = sadd.s32 %s268, 1
      %p272 = scmp.eq.s32.totalorder %s24, 1
      %p273 = scmp.ne.s32.totalorder %s268, %s270
      %p274 = scmp.eq.s32.totalorder %s24, 0
      %p275 = por %p273, %p274
      %p276 = scmp.ne.s32.totalorder %s268, %s270
      %p277 = scmp.eq.s32.totalorder %s29, 1
      %p278 = por %p276, %p277
      %p279 = scmp.ne.s32.totalorder %s270, %s271
      %p280 = scmp.eq.s32.totalorder %s29, 0
      %p281 = por %p279, %p280
      %p282 = scmp.ne.s32.totalorder %s270, %s271
      %p283 = scmp.eq.s32.totalorder %s30, 1
      %p284 = por %p282, %p283
      %p286 = scmp.ne.s32.totalorder %s271, %s285
      %p287 = scmp.eq.s32.totalorder %s30, 0
      %p288 = por %p286, %p287
      %s290 = sadd.s32 %s289, 1
      %p293 = scmp.eq.s32.totalorder %s24, 1
      %p294 = scmp.ne.s32.totalorder %s289, %s291
      %p295 = scmp.eq.s32.totalorder %s24, 0
      %p296 = por %p294, %p295
      %p297 = scmp.ne.s32.totalorder %s289, %s291
      %p298 = scmp.eq.s32.totalorder %s29, 1
      %p299 = por %p297, %p298
      %p300 = scmp.ne.s32.totalorder %s291, %s292
      %p301 = scmp.eq.s32.totalorder %s29, 0
      %p302 = por %p300, %p301
      %p303 = scmp.ne.s32.totalorder %s291, %s292
      %p304 = scmp.eq.s32.totalorder %s30, 1
      %p305 = por %p303, %p304
      %p307 = scmp.ne.s32.totalorder %s292, %s306
      %p308 = scmp.eq.s32.totalorder %s30, 0
      %p309 = por %p307, %p308
      %s311 = sadd.s32 %s310, 1
      %p314 = scmp.eq.s32.totalorder %s24, 1
      %p315 = scmp.ne.s32.totalorder %s310, %s312
      %p316 = scmp.eq.s32.totalorder %s24, 0
      %p317 = por %p315, %p316
      %p318 = scmp.ne.s32.totalorder %s310, %s312
      %p319 = scmp.eq.s32.totalorder %s29, 1
      %p320 = por %p318, %p319
      %p321 = scmp.ne.s32.totalorder %s312, %s313
      %p322 = scmp.eq.s32.totalorder %s29, 0
      %p323 = por %p321, %p322
      %p324 = scmp.ne.s32.totalorder %s312, %s313
      %p325 = scmp.eq.s32.totalorder %s30, 1
      %p326 = por %p324, %p325
      %p328 = scmp.ne.s32.totalorder %s313, %s327
      %p329 = scmp.eq.s32.totalorder %s30, 0
      %p330 = por %p328, %p329
      %s332 = sadd.s32 %s331, 1
      %p335 = scmp.eq.s32.totalorder %s24, 1
      %p336 = scmp.ne.s32.totalorder %s331, %s333
      %p337 = scmp.eq.s32.totalorder %s24, 0
      %p338 = por %p336, %p337
      %p339 = scmp.ne.s32.totalorder %s331, %s333
      %p340 = scmp.eq.s32.totalorder %s29, 1
      %p341 = por %p339, %p340
      %p342 = scmp.ne.s32.totalorder %s333, %s334
      %p343 = scmp.eq.s32.totalorder %s29, 0
      %p344 = por %p342, %p343
      %p345 = scmp.ne.s32.totalorder %s333, %s334
      %p346 = scmp.eq.s32.totalorder %s30, 1
      %p347 = por %p345, %p346
      %p349 = scmp.ne.s32.totalorder %s334, %s348
      %p350 = scmp.eq.s32.totalorder %s30, 0
      %p351 = por %p349, %p350
      %s352 = ssub.s32 %s24, %s31
      %p353 = scmp.eq.s32.totalorder %s352, 0
      %s355 = sadd.s32 %s354, 1
      %s356 = scalar_select %p353, %s354, %s355
      %p359 = pneg %p353
      %p360 = scmp.eq.s32.totalorder %s24, 1
      %p361 = por %p359, %p360
      %p362 = scmp.ne.s32.totalorder %s354, %s357
      %p363 = scmp.eq.s32.totalorder %s24, 0
      %p364 = por %p362, %p363
      %p365 = scmp.ne.s32.totalorder %s354, %s357
      %p366 = scmp.eq.s32.totalorder %s29, 1
      %p367 = por %p365, %p366
      %p368 = scmp.ne.s32.totalorder %s357, %s358
      %p369 = scmp.eq.s32.totalorder %s29, 0
      %p370 = por %p368, %p369
      %p371 = scmp.ne.s32.totalorder %s357, %s358
      %p372 = scmp.eq.s32.totalorder %s30, 1
      %p373 = por %p371, %p372
      %p375 = scmp.ne.s32.totalorder %s358, %s374
      %p376 = scmp.eq.s32.totalorder %s30, 0
      %p377 = por %p375, %p376
      %p378 = scmp.le.s32.totalorder 1, %s24
      %p379 = scmp.lt.s32.totalorder %s24, 3
      %p380 = pnand %p378, %p379
      %p381 = pneg %p380
      // Predicated region
      $region9: #{forward.1} parent=5 // pred_check
        _
      $region10: #{forward.1} parent=5 // pred_check_branch
        %383 = sbr.rel (%p380) target = $region12
      $region11: #{forward.1} parent=5 // pred_region
        %s384 = ssub.s32 %s24, 1
        // Predicated region
        $region13: #{forward.1} parent=11 // pred_check
          %p385 = pneg %p71
        $region14: #{forward.1} parent=11 // pred_check_branch
          %387 = sbr.rel (%p385) target = $region16
        $region15: #{forward.1} parent=11 // pred_region
          _
        $region16: #{forward.1} parent=11 // pred_fallthru
          _
        // Predicated region
        $region17: #{forward.1} parent=11 // pred_check
          %p388 = pneg %p92
        $region18: #{forward.1} parent=11 // pred_check_branch
          %390 = sbr.rel (%p388) target = $region20
        $region19: #{forward.1} parent=11 // pred_region
          _
        $region20: #{forward.1} parent=11 // pred_fallthru
          _
        // Predicated region
        $region21: #{forward.1} parent=11 // pred_check
          %p391 = pneg %p113
        $region22: #{forward.1} parent=11 // pred_check_branch
          %393 = sbr.rel (%p391) target = $region24
        $region23: #{forward.1} parent=11 // pred_region
          _
        $region24: #{forward.1} parent=11 // pred_fallthru
          _
        // Predicated region
        $region25: #{forward.1} parent=11 // pred_check
          %p394 = pneg %p134
        $region26: #{forward.1} parent=11 // pred_check_branch
          %396 = sbr.rel (%p394) target = $region28
        $region27: #{forward.1} parent=11 // pred_region
          _
        $region28: #{forward.1} parent=11 // pred_fallthru
          _
        // Predicated region
        $region29: #{forward.1} parent=11 // pred_check
          %p397 = pneg %p155
        $region30: #{forward.1} parent=11 // pred_check_branch
          %399 = sbr.rel (%p397) target = $region32
        $region31: #{forward.1} parent=11 // pred_region
          _
        $region32: #{forward.1} parent=11 // pred_fallthru
          _
        // Predicated region
        $region33: #{forward.1} parent=11 // pred_check
          %p400 = pneg %p176
        $region34: #{forward.1} parent=11 // pred_check_branch
          %402 = sbr.rel (%p400) target = $region36
        $region35: #{forward.1} parent=11 // pred_region
          _
        $region36: #{forward.1} parent=11 // pred_fallthru
          _
        // Predicated region
        $region37: #{forward.1} parent=11 // pred_check
          %p403 = pneg %p197
        $region38: #{forward.1} parent=11 // pred_check_branch
          %405 = sbr.rel (%p403) target = $region40
        $region39: #{forward.1} parent=11 // pred_region
          _
        $region40: #{forward.1} parent=11 // pred_fallthru
          _
        // Predicated region
        $region41: #{forward.1} parent=11 // pred_check
          %p406 = pneg %p218
        $region42: #{forward.1} parent=11 // pred_check_branch
          %408 = sbr.rel (%p406) target = $region44
        $region43: #{forward.1} parent=11 // pred_region
          _
        $region44: #{forward.1} parent=11 // pred_fallthru
          _
        // Predicated region
        $region45: #{forward.1} parent=11 // pred_check
          %p409 = pneg %p239
        $region46: #{forward.1} parent=11 // pred_check_branch
          %411 = sbr.rel (%p409) target = $region48
        $region47: #{forward.1} parent=11 // pred_region
          _
        $region48: #{forward.1} parent=11 // pred_fallthru
          _
        // Predicated region
        $region49: #{forward.1} parent=11 // pred_check
          %p412 = pneg %p260
        $region50: #{forward.1} parent=11 // pred_check_branch
          %414 = sbr.rel (%p412) target = $region52
        $region51: #{forward.1} parent=11 // pred_region
          _
        $region52: #{forward.1} parent=11 // pred_fallthru
          _
        // Predicated region
        $region53: #{forward.1} parent=11 // pred_check
          %p415 = pneg %p281
        $region54: #{forward.1} parent=11 // pred_check_branch
          %417 = sbr.rel (%p415) target = $region56
        $region55: #{forward.1} parent=11 // pred_region
          _
        $region56: #{forward.1} parent=11 // pred_fallthru
          _
        // Predicated region
        $region57: #{forward.1} parent=11 // pred_check
          %p418 = pneg %p302
        $region58: #{forward.1} parent=11 // pred_check_branch
          %420 = sbr.rel (%p418) target = $region60
        $region59: #{forward.1} parent=11 // pred_region
          _
        $region60: #{forward.1} parent=11 // pred_fallthru
          _
        // Predicated region
        $region61: #{forward.1} parent=11 // pred_check
          %p421 = pneg %p323
        $region62: #{forward.1} parent=11 // pred_check_branch
          %423 = sbr.rel (%p421) target = $region64
        $region63: #{forward.1} parent=11 // pred_region
          _
        $region64: #{forward.1} parent=11 // pred_fallthru
          _
        // Predicated region
        $region65: #{forward.1} parent=11 // pred_check
          %p424 = pneg %p344
        $region66: #{forward.1} parent=11 // pred_check_branch
          %426 = sbr.rel (%p424) target = $region68
        $region67: #{forward.1} parent=11 // pred_region
          _
        $region68: #{forward.1} parent=11 // pred_fallthru
          _
      $region12: #{forward.1} parent=5 // pred_fallthru
        _
      %p427 = scmp.lt.s32.totalorder %s24, 2
      // Predicated region
      $region69: #{forward.1} parent=5 // pred_check
        %p428 = pneg %p427
      $region70: #{forward.1} parent=5 // pred_check_branch
        %430 = sbr.rel (%p428) target = $region72
      $region71: #{forward.1} parent=5 // pred_region
        // Predicated region
        $region73: #{forward.1} parent=71 // pred_check
          %p431 = pneg %p44
        $region74: #{forward.1} parent=71 // pred_check_branch
          %433 = sbr.rel (%p431) target = $region76
        $region75: #{forward.1} parent=71 // pred_region
          %p434 = scmp.lt.s32.totalorder %s24, 1
          %s435 = scalar_select %p434, %s24, 1
          %s436 = smul.addr %s435, 4
          %s437 = smul.addr %s436, 8
          %s438 = scalar_lea.vmem %s0, %s437
        $region76: #{forward.1} parent=71 // pred_fallthru
          _
      $region72: #{forward.1} parent=5 // pred_fallthru
        _
      %p439 = scmp.le.s32.totalorder 1, %s24
      %p440 = scmp.lt.s32.totalorder %s24, 3
      %p441 = pnand %p439, %p440
      %p442 = pneg %p441
      // Predicated region
      $region77: #{forward.1} parent=5 // pred_check
        _
      $region78: #{forward.1} parent=5 // pred_check_branch
        %444 = sbr.rel (%p441) target = $region80
      $region79: #{forward.1} parent=5 // pred_region
        %s445 = ssub.s32 %s24, 1
        %p446 = scmp.lt.s32.totalorder %s29, 1
        %s447 = scalar_select %p446, %s29, 1
        %s448 = smul.addr %s447, 4
        %s449 = smul.addr %s448, 8
        %s450 = scalar_lea.vmem %s0, %s449
        %p451 = pneg %p50
        %p452 = pneg %p47
        %p453 = pneg %p71
        %p454 = pneg %p68
        %p455 = pneg %p92
        %p456 = pneg %p89
        %p457 = pneg %p113
        %p458 = pneg %p110
        %p459 = pneg %p134
        %p460 = pneg %p131
        %p461 = pneg %p155
        %p462 = pneg %p152
        %p463 = pneg %p176
        %p464 = pneg %p173
        %p465 = pneg %p197
        %p466 = pneg %p194
        %p467 = pneg %p218
        %p468 = pneg %p215
        %p469 = pneg %p239
        %p470 = pneg %p236
        %p471 = pneg %p260
        %p472 = pneg %p257
        %p473 = pneg %p281
        %p474 = pneg %p278
        %p475 = pneg %p302
        %p476 = pneg %p299
        %p477 = pneg %p323
        %p478 = pneg %p320
        %p479 = pneg %p344
        %p480 = pneg %p341
        %p481 = pneg %p370
        %p482 = pneg %p367
        %s483 = sand.u32 %s357, 1
        %s484 = scalar_lea.sflag [#allocation3], %s483
        %s485 = sand.u32 %s357, 1
        %s486 = scalar_lea.vmem [#allocation2], %s485
        %p487 = scmp.lt.s32.totalorder %s29, 1
        %s488 = scalar_select %p487, %s29, 1
        %s489 = smul.addr %s488, 4
        %s490 = smul.addr %s489, 8
        %s491 = scalar_lea.vmem %s0, %s490
        %v492 = vld [vmem:[%s491] sm:$0xff]
        %v493 = vld [vmem:[%s491 + $0x8] sm:$0xff]
        %v494 = vld [vmem:[%s491 + $0x10] sm:$0xff]
        %v495 = vld [vmem:[%s491 + $0x18] sm:$0xff]
        %vm500 = vcmask 1046528
        %v501 = vrot.slane %v492, 1
        %v502 = vrot.slane %v493, 1
        %v503 = vsel %vm500, %v501, %v502
        %v504 = vrot.slane %v494, 1
        %v505 = vsel %vm500, %v502, %v504
        %v506 = vrot.slane %v495, 1
        %v507 = vsel %vm500, %v504, %v506
        %508 = vrot.lane.b32.xlu0 %v503, 32
        %v509 = vpop.permute.xlu0 %508
        %510 = vrot.lane.b32.xlu0 %v505, 32
        %v511 = vpop.permute.xlu0 %510
        %512 = vrot.lane.b32.xlu0 %v507, 32
        %v513 = vpop.permute.xlu0 %512
        %514 = vrot.lane.b32.xlu0 %v506, 32
        %v515 = vpop.permute.xlu0 %514
        %vm520 = vcmask 1045504
        %v521 = vrot.slane %v492, 2
        %v522 = vrot.slane %v493, 2
        %v523 = vsel %vm520, %v521, %v522
        %v524 = vrot.slane %v494, 2
        %v525 = vsel %vm520, %v522, %v524
        %v526 = vrot.slane %v495, 2
        %v527 = vsel %vm520, %v524, %v526
        %528 = vrot.lane.b32.xlu0 %v523, 64
        %v529 = vpop.permute.xlu0 %528
        %530 = vrot.lane.b32.xlu0 %v525, 64
        %v531 = vpop.permute.xlu0 %530
        %532 = vrot.lane.b32.xlu0 %v527, 64
        %v533 = vpop.permute.xlu0 %532
        %534 = vrot.lane.b32.xlu0 %v526, 64
        %v535 = vpop.permute.xlu0 %534
        %vm540 = vcmask 1044480
        %v541 = vrot.slane %v492, 3
        %v542 = vrot.slane %v493, 3
        %v543 = vsel %vm540, %v541, %v542
        %v544 = vrot.slane %v494, 3
        %v545 = vsel %vm540, %v542, %v544
        %v546 = vrot.slane %v495, 3
        %v547 = vsel %vm540, %v544, %v546
        %548 = vrot.lane.b32.xlu0 %v543, 96
        %v549 = vpop.permute.xlu0 %548
        %550 = vrot.lane.b32.xlu0 %v545, 96
        %v551 = vpop.permute.xlu0 %550
        %552 = vrot.lane.b32.xlu0 %v547, 96
        %v553 = vpop.permute.xlu0 %552
        %554 = vrot.lane.b32.xlu0 %v546, 96
        %v555 = vpop.permute.xlu0 %554
        %vm560 = vcmask 1043456
        %v561 = vrot.slane %v492, 4
        %v562 = vrot.slane %v493, 4
        %v563 = vsel %vm560, %v561, %v562
        %v564 = vrot.slane %v494, 4
        %v565 = vsel %vm560, %v562, %v564
        %v566 = vrot.slane %v495, 4
        %v567 = vsel %vm560, %v564, %v566
        %vm568 = vcmask 261120
        %v569 = vsel %vm568, %v492, %v509
        %v570 = vsel %vm568, %v493, %v511
        %v571 = vsel %vm568, %v494, %v513
        %v572 = vsel %vm568, %v495, %v515
        %vm573 = vcmask 523264
        %v574 = vsel %vm573, %v569, %v529
        %v575 = vsel %vm573, %v570, %v531
        %v576 = vsel %vm573, %v571, %v533
        %v577 = vsel %vm573, %v572, %v535
        %vm578 = vcmask 785408
        %v579 = vsel %vm578, %v574, %v549
        %v580 = vsel %vm578, %v575, %v551
        %v581 = vsel %vm578, %v576, %v553
        %v582 = vsel %vm578, %v577, %v555
        %v583 = vld [vmem:[%s1] sm:$0xff]
        %v584 = vld [vmem:[%s1 + $0x8] sm:$0xff]
        %v585 = vld [vmem:[%s1 + $0x10] sm:$0xff]
        %v586 = vld [vmem:[%s1 + $0x18] sm:$0xff]
        %v587 = vld [vmem:[%s1 + $0x20] sm:$0xff]
        %v588 = vld [vmem:[%s1 + $0x28] sm:$0xff]
        %v589 = vld [vmem:[%s1 + $0x30] sm:$0xff]
        %v590 = vld [vmem:[%s1 + $0x38] sm:$0xff]
        %v591 = vld [vmem:[%s1 + $0x40] sm:$0xff]
        %v592 = vld [vmem:[%s1 + $0x48] sm:$0xff]
        %v593 = vld [vmem:[%s1 + $0x50] sm:$0xff]
        %v594 = vld [vmem:[%s1 + $0x58] sm:$0xff]
        %v595 = vld [vmem:[%s1 + $0x60] sm:$0xff]
        %v596 = vld [vmem:[%s1 + $0x68] sm:$0xff]
        %v597 = vld [vmem:[%s1 + $0x70] sm:$0xff]
        %v598 = vld [vmem:[%s1 + $0x78] sm:$0xff]
        %v599 = vld [vmem:[%s1 + $0x80] sm:$0xff]
        %v600 = vld [vmem:[%s1 + $0x88] sm:$0xff]
        %v601 = vld [vmem:[%s1 + $0x90] sm:$0xff]
        %v602 = vld [vmem:[%s1 + $0x98] sm:$0xff]
        %v603 = vld [vmem:[%s1 + $0xa0] sm:$0xff]
        %v604 = vld [vmem:[%s1 + $0xa8] sm:$0xff]
        %v605 = vld [vmem:[%s1 + $0xb0] sm:$0xff]
        %v606 = vld [vmem:[%s1 + $0xb8] sm:$0xff]
        %v607 = vld [vmem:[%s1 + $0xc0] sm:$0xff]
        %v608 = vld [vmem:[%s1 + $0xc8] sm:$0xff]
        %v609 = vld [vmem:[%s1 + $0xd0] sm:$0xff]
        %v610 = vld [vmem:[%s1 + $0xd8] sm:$0xff]
        %v611 = vld [vmem:[%s1 + $0xe0] sm:$0xff]
        %v612 = vld [vmem:[%s1 + $0xe8] sm:$0xff]
        %v613 = vld [vmem:[%s1 + $0xf0] sm:$0xff]
        %v614 = vld [vmem:[%s1 + $0xf8] sm:$0xff]
        %v615 = vld [vmem:[%s1 + $0x100] sm:$0xff]
        %v616 = vld [vmem:[%s1 + $0x108] sm:$0xff]
        %v617 = vld [vmem:[%s1 + $0x110] sm:$0xff]
        %v618 = vld [vmem:[%s1 + $0x118] sm:$0xff]
        %v619 = vld [vmem:[%s1 + $0x120] sm:$0xff]
        %v620 = vld [vmem:[%s1 + $0x128] sm:$0xff]
        %v621 = vld [vmem:[%s1 + $0x130] sm:$0xff]
        %v622 = vld [vmem:[%s1 + $0x138] sm:$0xff]
        %v623 = vld [vmem:[%s2] sm:$0x3]
        %v625 = vlaneseq
        %v626 = vshrl.u32 %v625, 7
        %v627 = vsub.s32 0, %v626
        %v628 = vrot.slane %v623, %v627
        %v629 = vlaneseq
        %v630 = vshrl.u32 %v629, 7
        %v631 = vsub.s32 1, %v630
        %v632 = vrot.slane %v623, %v631
        %v635 = vsel %vm568, %v563, 0
        %v637 = vsel %vm568, %v565, 0
        %v639 = vsel %vm568, %v567, 0
        %v641 = vsel %vm568, %v566, 0
        %643 = vmatprep.subr.mxu0 %v584
        %644 = vmatpush1.msra.mxu0 %v583
        %645 = vmatprep.subr.mxu0 %v586
        %646 = vmatpush1.msra.mxu0 %v585
        %647 = vmatprep.subr.mxu0 %v588
        %648 = vmatpush1.msra.mxu0 %v587
        %649 = vmatprep.subr.mxu0 %v590
        %650 = vmatpush1.msra.mxu0 %v589
        %651 = vmatprep.subr.mxu0 %v592
        %652 = vmatpush1.msra.mxu0 %v591
        %653 = vmatprep.subr.mxu0 %v594
        %654 = vmatpush1.msra.mxu0 %v593
        %655 = vmatprep.subr.mxu0 %v596
        %656 = vmatpush1.msra.mxu0 %v595
        %657 = vmatprep.subr.mxu0 %v598
        %658 = vmatpush1.msra.mxu0 %v597
        %659 = vmatprep.subr.mxu0 %v600
        %660 = vmatpush1.msra.mxu0 %v599
        %661 = vmatprep.subr.mxu0 %v602
        %662 = vmatpush1.msra.mxu0 %v601
        %663 = vmatprep.subr.mxu0 %v604
        %664 = vmatpush1.msra.mxu0 %v603
        %665 = vmatprep.subr.mxu0 %v606
        %666 = vmatpush1.msra.mxu0 %v605
        %667 = vmatprep.subr.mxu0 %v608
        %668 = vmatpush1.msra.mxu0 %v607
        %669 = vmatprep.subr.mxu0 %v610
        %670 = vmatpush1.msra.mxu0 %v609
        %671 = vmatprep.subr.mxu0 %v612
        %672 = vmatpush1.msra.mxu0 %v611
        %673 = vmatprep.subr.mxu0 %v614
        %674 = vmatpush1.msra.mxu0 %v613
        %675 = vmatprep.subr.mxu0 %v616
        %676 = vmatpush1.msra.mxu0 %v615
        %677 = vmatprep.subr.mxu0 %v618
        %678 = vmatpush1.msra.mxu0 %v617
        %679 = vmatprep.subr.mxu0 %v620
        %680 = vmatpush1.msra.mxu0 %v619
        %681 = vmatprep.subr.mxu0 %v622
        %682 = vmatpush1.msra.mxu0 %v621
        %683 = vmatprep.subr.mxu0 0.0
        %684 = vmatpush1.msra.mxu0 0.0
        %685 = vmatprep.subr.mxu0 0.0
        %686 = vmatpush1.msra.mxu0 0.0
        %687 = vmatprep.subr.mxu0 0.0
        %688 = vmatpush1.msra.mxu0 0.0
        %689 = vmatprep.subr.mxu0 0.0
        %690 = vmatpush1.msra.mxu0 0.0
        %691 = vmatprep.subr.mxu0 0.0
        %692 = vmatpush1.msra.mxu0 0.0
        %693 = vmatprep.subr.mxu0 0.0
        %694 = vmatpush1.msra.mxu0 0.0
        %695 = vmatprep.subr.mxu0 0.0
        %696 = vmatpush1.msra.mxu0 0.0
        %697 = vmatprep.subr.mxu0 0.0
        %698 = vmatpush1.msra.mxu0 0.0
        %699 = vmatprep.subr.mxu0 0.0
        %700 = vmatpush1.msra.mxu0 0.0
        %701 = vmatprep.subr.mxu0 0.0
        %702 = vmatpush1.msra.mxu0 0.0
        %703 = vmatprep.subr.mxu0 0.0
        %704 = vmatpush1.msra.mxu0 0.0
        %705 = vmatprep.subr.mxu0 0.0
        %706 = vmatpush1.msra.mxu0 0.0
        %707 = vmatprep.mubr.f32.mxu0 %v635
        %708 = vmatmul.mubr.f32.gmra.mrb[0].mxu0 %v579
        %v709 = vpop.f32.mrb[0].mxu0
        %v710 = vadd.f32 %v628, %v709
        %v711 = vpop.f32.mrb[0].mxu0
        %v712 = vadd.f32 %v632, %v711
        %713 = vmatprep.mubr.f32.mxu0 %v637
        %714 = vmatmul.mubr.f32.gmra.mrb[0].mxu0 %v580
        %v715 = vpop.f32.mrb[0].mxu0
        %v716 = vadd.f32 %v628, %v715
        %v717 = vpop.f32.mrb[0].mxu0
        %v718 = vadd.f32 %v632, %v717
        %719 = vmatprep.mubr.f32.mxu0 %v639
        %720 = vmatmul.mubr.f32.gmra.mrb[0].mxu0 %v581
        %v721 = vpop.f32.mrb[0].mxu0
        %v722 = vadd.f32 %v628, %v721
        %v723 = vpop.f32.mrb[0].mxu0
        %v724 = vadd.f32 %v632, %v723
        %725 = vmatprep.mubr.f32.mxu0 %v641
        %726 = vmatmul.mubr.f32.gmra.mrb[0].mxu0 %v582
        %v727 = vpop.f32.mrb[0].mxu0
        %v728 = vadd.f32 %v628, %v727
        %v729 = vpop.f32.mrb[0].mxu0
        %v730 = vadd.f32 %v632, %v729
        %731 = vdwg.mxu0
        %v732 = vsub.f32 0.0, %v710
        %v733 = vsub.f32 0.0, %v712
        %v734 = vsub.f32 0.0, %v716
        %v735 = vsub.f32 0.0, %v718
        %v736 = vsub.f32 0.0, %v722
        %v737 = vsub.f32 0.0, %v724
        %v738 = vsub.f32 0.0, %v728
        %v739 = vsub.f32 0.0, %v730
        %v740 = vmul.f32 %v732, 1.442695
        %v741 = vpow.pop %v740
        %v742 = vmul.f32 %v733, 1.442695
        %v743 = vpow.pop %v742
        %v744 = vmul.f32 %v734, 1.442695
        %v745 = vpow.pop %v744
        %v746 = vmul.f32 %v735, 1.442695
        %v747 = vpow.pop %v746
        %v748 = vmul.f32 %v736, 1.442695
        %v749 = vpow.pop %v748
        %v750 = vmul.f32 %v737, 1.442695
        %v751 = vpow.pop %v750
        %v752 = vmul.f32 %v738, 1.442695
        %v753 = vpow.pop %v752
        %v754 = vmul.f32 %v739, 1.442695
        %v755 = vpow.pop %v754
        %v756 = vadd.f32 %v741, 1.0
        %v757 = vadd.f32 %v743, 1.0
        %v758 = vadd.f32 %v745, 1.0
        %v759 = vadd.f32 %v747, 1.0
        %v760 = vadd.f32 %v749, 1.0
        %v761 = vadd.f32 %v751, 1.0
        %v762 = vadd.f32 %v753, 1.0
        %v763 = vadd.f32 %v755, 1.0
        %v764 = vrcp.pop %v756
        %v765 = vmul.f32 1.0, %v764
        %v766 = vrcp.pop %v757
        %v767 = vmul.f32 1.0, %v766
        %v768 = vrcp.pop %v758
        %v769 = vmul.f32 1.0, %v768
        %v770 = vrcp.pop %v759
        %v771 = vmul.f32 1.0, %v770
        %v772 = vrcp.pop %v760
        %v773 = vmul.f32 1.0, %v772
        %v774 = vrcp.pop %v761
        %v775 = vmul.f32 1.0, %v774
        %v776 = vrcp.pop %v762
        %v777 = vmul.f32 1.0, %v776
        %v778 = vrcp.pop %v763
        %v779 = vmul.f32 1.0, %v778
        %v780 = vld [vmem:[%s3] sm:$0xff]
        %v781 = vld [vmem:[%s3 + $0x8] sm:$0x3f]
        %vm782 = vcmask 228352
        %v784 = vsel %vm782, %v780, 0
        %v787 = vsel %vm782, %v781, 0
        %v790 = vsel %vm560, %v777, 0
        %v793 = vsel %vm560, %v779, 0
        %795 = vmatprep.subr.mxu0 %v767
        %796 = vmatpush1.msra.mxu0 %v765
        %797 = vmatprep.subr.mxu0 %v771
        %798 = vmatpush1.msra.mxu0 %v769
        %799 = vmatprep.subr.mxu0 %v775
        %800 = vmatpush1.msra.mxu0 %v773
        %801 = vmatprep.subr.mxu0 %v793
        %802 = vmatpush1.msra.mxu0 %v790
        %803 = vmatprep.subr.mxu0 0.0
        %804 = vmatpush1.msra.mxu0 0.0
        %805 = vmatprep.subr.mxu0 0.0
        %806 = vmatpush1.msra.mxu0 0.0
        %807 = vmatprep.subr.mxu0 0.0
        %808 = vmatpush1.msra.mxu0 0.0
        %809 = vmatprep.subr.mxu0 0.0
        %810 = vmatpush1.msra.mxu0 0.0
        %811 = vmatprep.subr.mxu0 0.0
        %812 = vmatpush1.msra.mxu0 0.0
        %813 = vmatprep.subr.mxu0 0.0
        %814 = vmatpush1.msra.mxu0 0.0
        %815 = vmatprep.subr.mxu0 0.0
        %816 = vmatpush1.msra.mxu0 0.0
        %817 = vmatprep.subr.mxu0 0.0
        %818 = vmatpush1.msra.mxu0 0.0
        %819 = vmatprep.subr.mxu0 0.0
        %820 = vmatpush1.msra.mxu0 0.0
        %821 = vmatprep.subr.mxu0 0.0
        %822 = vmatpush1.msra.mxu0 0.0
        %823 = vmatprep.subr.mxu0 0.0
        %824 = vmatpush1.msra.mxu0 0.0
        %825 = vmatprep.subr.mxu0 0.0
        %826 = vmatpush1.msra.mxu0 0.0
        %827 = vmatprep.subr.mxu0 0.0
        %828 = vmatpush1.msra.mxu0 0.0
        %829 = vmatprep.subr.mxu0 0.0
        %830 = vmatpush1.msra.mxu0 0.0
        %831 = vmatprep.subr.mxu0 0.0
        %832 = vmatpush1.msra.mxu0 0.0
        %833 = vmatprep.subr.mxu0 0.0
        %834 = vmatpush1.msra.mxu0 0.0
        %835 = vmatprep.subr.mxu0 0.0
        %836 = vmatpush1.msra.mxu0 0.0
        %837 = vmatprep.subr.mxu0 0.0
        %838 = vmatpush1.msra.mxu0 0.0
        %839 = vmatprep.subr.mxu0 0.0
        %840 = vmatpush1.msra.mxu0 0.0
        %841 = vmatprep.subr.mxu0 0.0
        %842 = vmatpush1.msra.mxu0 0.0
        %843 = vmatprep.subr.mxu0 0.0
        %844 = vmatpush1.msra.mxu0 0.0
        %845 = vmatprep.subr.mxu0 0.0
        %846 = vmatpush1.msra.mxu0 0.0
        %847 = vmatprep.subr.mxu0 0.0
        %848 = vmatpush1.msra.mxu0 0.0
        %849 = vmatprep.subr.mxu0 0.0
        %850 = vmatpush1.msra.mxu0 0.0
        %851 = vmatprep.subr.mxu0 0.0
        %852 = vmatpush1.msra.mxu0 0.0
        %853 = vmatprep.subr.mxu0 0.0
        %854 = vmatpush1.msra.mxu0 0.0
        %855 = vmatprep.subr.mxu0 0.0
        %856 = vmatpush1.msra.mxu0 0.0
        %857 = vmatprep.subr.mxu0 0.0
        %858 = vmatpush1.msra.mxu0 0.0
        %859 = vmatprep.mubr.f32.mxu0 0.0
        %860 = vmatmul.mubr.f32.gmra.mrb[0].mxu0 %v784
        %v861 = vpop.f32.mrb[0].mxu0
        %v862 = vadd.f32 0.0, %v861
        %v863 = vpop.f32.mrb[0].mxu0
        %v864 = vadd.f32 0.0, %v863
        %865 = vmatprep.mubr.f32.mxu0 0.0
        %866 = vmatmul.mubr.f32.gmra.mrb[0].mxu0 %v787
        %v867 = vpop.f32.mrb[0].mxu0
        %v868 = vadd.f32 0.0, %v867
        %v869 = vpop.f32.mrb[0].mxu0
        %v870 = vadd.f32 0.0, %v869
        %871 = vdwg.mxu0
        %v872 = vld [vmem:[%s4] sm:$0xff]
        %v873 = vld [vmem:[%s4 + $0x8] sm:$0xff]
        %v874 = vld [vmem:[%s4 + $0x10] sm:$0xff]
        %v875 = vld [vmem:[%s4 + $0x18] sm:$0xff]
        %v876 = vld [vmem:[%s4 + $0x20] sm:$0xff]
        %v877 = vld [vmem:[%s4 + $0x28] sm:$0xff]
        %v878 = vld [vmem:[%s4 + $0x30] sm:$0xff]
        %v879 = vld [vmem:[%s4 + $0x38] sm:$0xff]
        %v880 = vld [vmem:[%s4 + $0x40] sm:$0xff]
        %v881 = vld [vmem:[%s4 + $0x48] sm:$0xff]
        %v882 = vld [vmem:[%s4 + $0x50] sm:$0xff]
        %v883 = vld [vmem:[%s4 + $0x58] sm:$0xff]
        %v884 = vld [vmem:[%s4 + $0x60] sm:$0xff]
        %v885 = vld [vmem:[%s4 + $0x68] sm:$0xff]
        %v886 = vld [vmem:[%s4 + $0x70] sm:$0xff]
        %v887 = vld [vmem:[%s4 + $0x78] sm:$0xff]
        %v888 = vld [vmem:[%s4 + $0x80] sm:$0xff]
        %v889 = vld [vmem:[%s4 + $0x88] sm:$0xff]
        %v890 = vld [vmem:[%s4 + $0x90] sm:$0xff]
        %v891 = vld [vmem:[%s4 + $0x98] sm:$0xff]
        %v892 = vld [vmem:[%s4 + $0xa0] sm:$0xff]
        %vm893 = vcmask 326656
        %v895 = vsel %vm893, %v864, 0
        %v898 = vsel %vm893, %v870, 0
        %900 = vmatprep.subr.mxu0 0.0
        %901 = vmatpush1.msra.mxu0 %v872
        %902 = vmatprep.subr.mxu0 0.0
        %903 = vmatpush1.msra.mxu0 %v873
        %904 = vmatprep.subr.mxu0 0.0
        %905 = vmatpush1.msra.mxu0 %v874
        %906 = vmatprep.subr.mxu0 0.0
        %907 = vmatpush1.msra.mxu0 %v875
        %908 = vmatprep.subr.mxu0 0.0
        %909 = vmatpush1.msra.mxu0 %v876
        %910 = vmatprep.subr.mxu0 0.0
        %911 = vmatpush1.msra.mxu0 %v877
        %912 = vmatprep.subr.mxu0 0.0
        %913 = vmatpush1.msra.mxu0 %v878
        %914 = vmatprep.subr.mxu0 0.0
        %915 = vmatpush1.msra.mxu0 %v879
        %916 = vmatprep.subr.mxu0 0.0
        %917 = vmatpush1.msra.mxu0 %v880
        %918 = vmatprep.subr.mxu0 0.0
        %919 = vmatpush1.msra.mxu0 %v881
        %920 = vmatprep.subr.mxu0 0.0
        %921 = vmatpush1.msra.mxu0 %v882
        %922 = vmatprep.subr.mxu0 0.0
        %923 = vmatpush1.msra.mxu0 %v883
        %924 = vmatprep.subr.mxu0 0.0
        %925 = vmatpush1.msra.mxu0 %v884
        %926 = vmatprep.subr.mxu0 0.0
        %927 = vmatpush1.msra.mxu0 %v885
        %928 = vmatprep.subr.mxu0 0.0
        %929 = vmatpush1.msra.mxu0 %v886
        %930 = vmatprep.subr.mxu0 0.0
        %931 = vmatpush1.msra.mxu0 %v887
        %932 = vmatprep.subr.mxu0 0.0
        %933 = vmatpush1.msra.mxu0 %v888
        %934 = vmatprep.subr.mxu0 0.0
        %935 = vmatpush1.msra.mxu0 %v889
        %936 = vmatprep.subr.mxu0 0.0
        %937 = vmatpush1.msra.mxu0 %v890
        %938 = vmatprep.subr.mxu0 0.0
        %939 = vmatpush1.msra.mxu0 %v891
        %940 = vmatprep.subr.mxu0 0.0
        %941 = vmatpush1.msra.mxu0 %v892
        %942 = vmatprep.subr.mxu0 0.0
        %943 = vmatpush1.msra.mxu0 0.0
        %944 = vmatprep.subr.mxu0 0.0
        %945 = vmatpush1.msra.mxu0 0.0
        %946 = vmatprep.subr.mxu0 0.0
        %947 = vmatpush1.msra.mxu0 0.0
        %948 = vmatprep.subr.mxu0 0.0
        %949 = vmatpush1.msra.mxu0 0.0
        %950 = vmatprep.subr.mxu0 0.0
        %951 = vmatpush1.msra.mxu0 0.0
        %952 = vmatprep.subr.mxu0 0.0
        %953 = vmatpush1.msra.mxu0 0.0
        %954 = vmatprep.subr.mxu0 0.0
        %955 = vmatpush1.msra.mxu0 0.0
        %956 = vmatprep.subr.mxu0 0.0
        %957 = vmatpush1.msra.mxu0 0.0
        %958 = vmatprep.subr.mxu0 0.0
        %959 = vmatpush1.msra.mxu0 0.0
        %960 = vmatprep.subr.mxu0 0.0
        %961 = vmatpush1.msra.mxu0 0.0
        %962 = vmatprep.subr.mxu0 0.0
        %963 = vmatpush1.msra.mxu0 0.0
        %964 = vmatprep.mubr.f32.mxu0 %v895
        %965 = vmatmul.mubr.f32.gmra.mrb[0].mxu0 %v862
        %v966 = vpop.f32.mrb[0].mxu0
        %v967 = vadd.f32 0.0, %v966
        %v968 = vpop.f32.mrb[0].mxu0
        %969 = vmatprep.mubr.f32.mxu0 %v898
        %970 = vmatmul.mubr.f32.gmra.mrb[0].mxu0 %v868
        %v971 = vpop.f32.mrb[0].mxu0
        %v972 = vadd.f32 0.0, %v971
        %v973 = vpop.f32.mrb[0].mxu0
        %974 = vdwg.mxu0
        %v977 = vrot.slane %v967, 1
        %v978 = vrot.slane %v972, 1
        %v979 = vsel %vm500, %v977, %v978
        %980 = vrot.lane.b32.xlu0 %v979, 14
        %v981 = vpop.permute.xlu0 %980
        %982 = vrot.lane.b32.xlu0 %v978, 14
        %v983 = vpop.permute.xlu0 %982
        %v986 = vrot.slane %v967, 2
        %v987 = vrot.slane %v972, 2
        %v988 = vsel %vm520, %v986, %v987
        %989 = vrot.lane.b32.xlu0 %v988, 28
        %v990 = vpop.permute.xlu0 %989
        %991 = vrot.lane.b32.xlu0 %v987, 28
        %v992 = vpop.permute.xlu0 %991
        %v995 = vrot.slane %v967, 3
        %v996 = vrot.slane %v972, 3
        %v997 = vsel %vm540, %v995, %v996
        %998 = vrot.lane.b32.xlu0 %v997, 42
        %v999 = vpop.permute.xlu0 %998
        %1000 = vrot.lane.b32.xlu0 %v996, 42
        %v1001 = vpop.permute.xlu0 %1000
        %v1004 = vrot.slane %v967, 4
        %v1005 = vrot.slane %v972, 4
        %v1006 = vsel %vm560, %v1004, %v1005
        %1007 = vrot.lane.b32.xlu0 %v1006, 56
        %v1008 = vpop.permute.xlu0 %1007
        %1009 = vrot.lane.b32.xlu0 %v1005, 56
        %v1010 = vpop.permute.xlu0 %1009
        %1013 = vrot.lane.b32.xlu0 %v967, 56
        %v1014 = vpop.permute.xlu0 %1013
        %1015 = vrot.lane.b32.xlu0 %v972, 56
        %v1016 = vpop.permute.xlu0 %1015
        %1019 = vrot.lane.b32.xlu0 %v979, 70
        %v1020 = vpop.permute.xlu0 %1019
        %1021 = vrot.lane.b32.xlu0 %v978, 70
        %v1022 = vpop.permute.xlu0 %1021
        %1025 = vrot.lane.b32.xlu0 %v988, 84
        %v1026 = vpop.permute.xlu0 %1025
        %1027 = vrot.lane.b32.xlu0 %v987, 84
        %v1028 = vpop.permute.xlu0 %1027
        %1031 = vrot.lane.b32.xlu0 %v997, 98
        %v1032 = vpop.permute.xlu0 %1031
        %1033 = vrot.lane.b32.xlu0 %v996, 98
        %v1034 = vpop.permute.xlu0 %1033
        %1037 = vrot.lane.b32.xlu0 %v1006, 112
        %v1038 = vpop.permute.xlu0 %1037
        %1039 = vrot.lane.b32.xlu0 %v1005, 112
        %v1040 = vpop.permute.xlu0 %1039
        %1043 = vrot.lane.b32.xlu0 %v967, 112
        %v1044 = vpop.permute.xlu0 %1043
        %1045 = vrot.lane.b32.xlu0 %v972, 112
        %v1046 = vpop.permute.xlu0 %1045
        %1049 = vrot.lane.b32.xlu0 %v979, 126
        %v1050 = vpop.permute.xlu0 %1049
        %1051 = vrot.lane.b32.xlu0 %v978, 126
        %v1052 = vpop.permute.xlu0 %1051
        %1055 = vrot.lane.b32.xlu0 %v988, 12
        %v1056 = vpop.permute.xlu0 %1055
        %1057 = vrot.lane.b32.xlu0 %v987, 12
        %v1058 = vpop.permute.xlu0 %1057
        %1061 = vrot.lane.b32.xlu0 %v997, 26
        %v1062 = vpop.permute.xlu0 %1061
        %1063 = vrot.lane.b32.xlu0 %v996, 26
        %v1064 = vpop.permute.xlu0 %1063
        %1067 = vrot.lane.b32.xlu0 %v1006, 40
        %v1068 = vpop.permute.xlu0 %1067
        %1069 = vrot.lane.b32.xlu0 %v1005, 40
        %v1070 = vpop.permute.xlu0 %1069
        %1073 = vrot.lane.b32.xlu0 %v967, 40
        %v1074 = vpop.permute.xlu0 %1073
        %1075 = vrot.lane.b32.xlu0 %v972, 40
        %v1076 = vpop.permute.xlu0 %1075
        %vm1079 = vcmask 113664
        %v1080 = vsel %vm1079, %v967, %v981
        %v1081 = vsel %vm1079, %v972, %v983
        %v1082 = vsel %vm782, %v1080, %v990
        %v1083 = vsel %vm782, %v1081, %v992
        %vm1084 = vcmask 343040
        %v1085 = vsel %vm1084, %v1082, %v999
        %v1086 = vsel %vm1084, %v1083, %v1001
        %vm1087 = vcmask 457728
        %v1088 = vsel %vm1087, %v1085, %v1008
        %v1089 = vsel %vm1087, %v1086, %v1010
        %vm1090 = vcmask 572416
        %v1091 = vsel %vm1090, %v1088, %v1014
        %v1092 = vsel %vm1090, %v1089, %v1016
        %vm1093 = vcmask 687104
        %v1094 = vsel %vm1093, %v1091, %v1020
        %v1095 = vsel %vm1093, %v1092, %v1022
        %vm1096 = vcmask 801792
        %v1097 = vsel %vm1096, %v1094, %v1026
        %v1098 = vsel %vm1096, %v1095, %v1028
        %vm1099 = vcmask 916480
        %v1100 = vsel %vm1099, %v1097, %v1032
        %v1101 = vsel %vm1099, %v1098, %v1034
        %vm1102 = vcmask 1031168
        %v1103 = vsel %vm1102, %v1100, %v1038
        %v1104 = vsel %vm1102, %v1101, %v1040
        %vm1105 = vcmask 97280
        %v1106 = vsel %vm1105, %v1038, %v1044
        %v1107 = vsel %vm1105, %v1040, %v1046
        %vm1108 = vcmask 211968
        %v1109 = vsel %vm1108, %v1106, %v1050
        %v1110 = vsel %vm1108, %v1107, %v1052
        %v1111 = vsel %vm893, %v1109, %v1056
        %v1112 = vsel %vm893, %v1110, %v1058
        %vm1113 = vcmask 441344
        %v1114 = vsel %vm1113, %v1111, %v1062
        %v1115 = vsel %vm1113, %v1112, %v1064
        %vm1116 = vcmask 556032
        %v1117 = vsel %vm1116, %v1114, %v1068
        %v1118 = vsel %vm1116, %v1115, %v1070
        %vm1119 = vcmask 670720
        %v1120 = vsel %vm1119, %v1117, %v1074
        %v1121 = vsel %vm1119, %v1118, %v1076
        %1122 = vrot.lane.b32.xlu0 %v967, 86
        %v1123 = vpop.permute.xlu0 %1122
        %1124 = vrot.lane.b32.xlu0 %v972, 86
        %v1125 = vpop.permute.xlu0 %1124
        %1128 = vrot.lane.b32.xlu0 %v979, 100
        %v1129 = vpop.permute.xlu0 %1128
        %1130 = vrot.lane.b32.xlu0 %v978, 100
        %v1131 = vpop.permute.xlu0 %1130
        %1134 = vrot.lane.b32.xlu0 %v988, 114
        %v1135 = vpop.permute.xlu0 %1134
        %1136 = vrot.lane.b32.xlu0 %v987, 114
        %v1137 = vpop.permute.xlu0 %1136
        %vm1142 = vcmask 1040384
        %v1143 = vrot.slane %v967, 7
        %v1144 = vrot.slane %v972, 7
        %v1145 = vsel %vm1142, %v1143, %v1144
        %1148 = vrot.lane.b32.xlu0 %v967, 14
        %v1149 = vpop.permute.xlu0 %1148
        %1150 = vrot.lane.b32.xlu0 %v972, 14
        %v1151 = vpop.permute.xlu0 %1150
        %1154 = vrot.lane.b32.xlu0 %v979, 28
        %v1155 = vpop.permute.xlu0 %1154
        %1156 = vrot.lane.b32.xlu0 %v978, 28
        %v1157 = vpop.permute.xlu0 %1156
        %1160 = vrot.lane.b32.xlu0 %v988, 42
        %v1161 = vpop.permute.xlu0 %1160
        %1162 = vrot.lane.b32.xlu0 %v987, 42
        %v1163 = vpop.permute.xlu0 %1162
        %1166 = vrot.lane.b32.xlu0 %v997, 56
        %v1167 = vpop.permute.xlu0 %1166
        %1168 = vrot.lane.b32.xlu0 %v996, 56
        %v1169 = vpop.permute.xlu0 %1168
        %1172 = vrot.lane.b32.xlu0 %v1143, 56
        %v1173 = vpop.permute.xlu0 %1172
        %1174 = vrot.lane.b32.xlu0 %v1145, 56
        %v1175 = vpop.permute.xlu0 %1174
        %1178 = vrot.lane.b32.xlu0 %v967, 70
        %v1179 = vpop.permute.xlu0 %1178
        %1180 = vrot.lane.b32.xlu0 %v972, 70
        %v1181 = vpop.permute.xlu0 %1180
        %1184 = vrot.lane.b32.xlu0 %v979, 84
        %v1185 = vpop.permute.xlu0 %1184
        %1186 = vrot.lane.b32.xlu0 %v978, 84
        %v1187 = vpop.permute.xlu0 %1186
        %1190 = vrot.lane.b32.xlu0 %v988, 98
        %v1191 = vpop.permute.xlu0 %1190
        %1192 = vrot.lane.b32.xlu0 %v987, 98
        %v1193 = vpop.permute.xlu0 %1192
        %1196 = vrot.lane.b32.xlu0 %v997, 112
        %v1197 = vpop.permute.xlu0 %1196
        %1198 = vrot.lane.b32.xlu0 %v996, 112
        %v1199 = vpop.permute.xlu0 %1198
        %v1202 = vsel %vm1079, %v1123, %v1129
        %v1203 = vsel %vm1079, %v1125, %v1131
        %v1204 = vsel %vm782, %v1202, %v1135
        %v1205 = vsel %vm782, %v1203, %v1137
        %v1206 = vsel %vm1084, %v1204, %v997
        %v1207 = vsel %vm1084, %v1205, %v996
        %v1208 = vsel %vm1087, %v1206, %v1143
        %v1209 = vsel %vm1087, %v1207, %v1145
        %v1210 = vsel %vm1090, %v1208, %v1149
        %v1211 = vsel %vm1090, %v1209, %v1151
        %v1212 = vsel %vm1093, %v1210, %v1155
        %v1213 = vsel %vm1093, %v1211, %v1157
        %v1214 = vsel %vm1096, %v1212, %v1161
        %v1215 = vsel %vm1096, %v1213, %v1163
        %v1216 = vsel %vm1099, %v1214, %v1167
        %v1217 = vsel %vm1099, %v1215, %v1169
        %v1218 = vsel %vm1102, %v1216, %v1173
        %v1219 = vsel %vm1102, %v1217, %v1175
        %v1220 = vsel %vm1105, %v1173, %v1179
        %v1221 = vsel %vm1105, %v1175, %v1181
        %v1222 = vsel %vm1108, %v1220, %v1185
        %v1223 = vsel %vm1108, %v1221, %v1187
        %v1224 = vsel %vm893, %v1222, %v1191
        %v1225 = vsel %vm893, %v1223, %v1193
        %v1226 = vsel %vm1113, %v1224, %v1197
        %v1227 = vsel %vm1113, %v1225, %v1199
        %v1232 = vrot.slane %v1218, 1
        %v1233 = vrot.slane %v1219, 1
        %v1234 = vsel %vm500, %v1232, %v1233
        %v1235 = vrot.slane %v1226, 1
        %v1236 = vrot.slane %v1227, 1
        %v1237 = vsel %vm500, %v1235, %v1236
        %1238 = vrot.lane.b32.xlu0 %v1234, 96
        %v1239 = vpop.permute.xlu0 %1238
        %1240 = vrot.lane.b32.xlu0 %v1237, 96
        %v1241 = vpop.permute.xlu0 %1240
        %1242 = vrot.lane.b32.xlu0 %v1233, 96
        %v1243 = vpop.permute.xlu0 %1242
        %1244 = vrot.lane.b32.xlu0 %v1236, 96
        %v1245 = vpop.permute.xlu0 %1244
        %v1246 = vsel %vm578, %v1239, %v1241
        %v1247 = vsel %vm578, %v1243, %v1245
        %v1252 = vsel %vm578, %v1120, %v1239
        %v1253 = vsel %vm578, %v1121, %v1243
        %v1254 = vld [vmem:[%s5] sm:$0xff]
        %v1255 = vld [vmem:[%s5 + $0x8] sm:$0xff]
        %v1256 = vld [vmem:[%s5 + $0x10] sm:$0xff]
        %v1257 = vld [vmem:[%s5 + $0x18] sm:$0xff]
        %v1258 = vld [vmem:[%s5 + $0x20] sm:$0xff]
        %v1259 = vld [vmem:[%s5 + $0x28] sm:$0xff]
        %v1260 = vld [vmem:[%s5 + $0x30] sm:$0xff]
        %v1261 = vld [vmem:[%s5 + $0x38] sm:$0xff]
        %v1262 = vld [vmem:[%s5 + $0x40] sm:$0xff]
        %v1263 = vld [vmem:[%s5 + $0x48] sm:$0xff]
        %v1264 = vld [vmem:[%s5 + $0x50] sm:$0xff]
        %v1265 = vld [vmem:[%s5 + $0x58] sm:$0xff]
        %v1266 = vld [vmem:[%s5 + $0x60] sm:$0xff]
        %v1267 = vld [vmem:[%s5 + $0x68] sm:$0xff]
        %v1268 = vld [vmem:[%s5 + $0x70] sm:$0xff]
        %v1269 = vld [vmem:[%s5 + $0x78] sm:$0xff]
        %v1270 = vld [vmem:[%s5 + $0x80] sm:$0xff]
        %v1271 = vld [vmem:[%s5 + $0x88] sm:$0xff]
        %v1272 = vld [vmem:[%s5 + $0x90] sm:$0xff]
        %v1273 = vld [vmem:[%s5 + $0x98] sm:$0xff]
        %v1274 = vld [vmem:[%s5 + $0xa0] sm:$0xff]
        %v1275 = vld [vmem:[%s5 + $0xa8] sm:$0xff]
        %v1276 = vld [vmem:[%s5 + $0xb0] sm:$0xff]
        %v1277 = vld [vmem:[%s5 + $0xb8] sm:$0xff]
        %v1278 = vld [vmem:[%s5 + $0xc0] sm:$0xff]
        %v1279 = vld [vmem:[%s5 + $0xc8] sm:$0xff]
        %v1280 = vld [vmem:[%s5 + $0xd0] sm:$0xff]
        %v1281 = vld [vmem:[%s5 + $0xd8] sm:$0xff]
        %v1282 = vld [vmem:[%s5 + $0xe0] sm:$0xff]
        %v1283 = vld [vmem:[%s5 + $0xe8] sm:$0xff]
        %v1284 = vld [vmem:[%s5 + $0xf0] sm:$0xff]
        %v1285 = vld [vmem:[%s5 + $0xf8] sm:$0xff]
        %v1286 = vld [vmem:[%s5 + $0x100] sm:$0xff]
        %v1287 = vld [vmem:[%s5 + $0x108] sm:$0xff]
        %v1288 = vld [vmem:[%s5 + $0x110] sm:$0xff]
        %v1289 = vld [vmem:[%s5 + $0x118] sm:$0xff]
        %v1290 = vld [vmem:[%s5 + $0x120] sm:$0xff]
        %v1291 = vld [vmem:[%s5 + $0x128] sm:$0xff]
        %v1292 = vld [vmem:[%s5 + $0x130] sm:$0xff]
        %v1293 = vld [vmem:[%s5 + $0x138] sm:$0xff]
        %v1294 = vld [vmem:[%s5 + $0x140] sm:$0xff]
        %v1295 = vld [vmem:[%s5 + $0x148] sm:$0xff]
        %v1296 = vld [vmem:[%s5 + $0x150] sm:$0xff]
        %v1297 = vld [vmem:[%s5 + $0x158] sm:$0xff]
        %v1298 = vld [vmem:[%s5 + $0x160] sm:$0xff]
        %v1299 = vld [vmem:[%s5 + $0x168] sm:$0xff]
        %v1300 = vld [vmem:[%s5 + $0x170] sm:$0xff]
        %v1301 = vld [vmem:[%s5 + $0x178] sm:$0xff]
        %v1302 = vld [vmem:[%s5 + $0x180] sm:$0xff]
        %v1303 = vld [vmem:[%s5 + $0x188] sm:$0xff]
        %v1304 = vld [vmem:[%s5 + $0x190] sm:$0xff]
        %v1305 = vld [vmem:[%s5 + $0x198] sm:$0xff]
        %v1306 = vld [vmem:[%s5 + $0x1a0] sm:$0xff]
        %v1307 = vld [vmem:[%s5 + $0x1a8] sm:$0xff]
        %v1308 = vld [vmem:[%s5 + $0x1b0] sm:$0xff]
        %v1309 = vld [vmem:[%s5 + $0x1b8] sm:$0xff]
        %v1310 = vld [vmem:[%s5 + $0x1c0] sm:$0xff]
        %v1311 = vld [vmem:[%s5 + $0x1c8] sm:$0xff]
        %v1312 = vld [vmem:[%s5 + $0x1d0] sm:$0xff]
        %v1313 = vld [vmem:[%s5 + $0x1d8] sm:$0xff]
        %v1314 = vld [vmem:[%s5 + $0x1e0] sm:$0xff]
        %v1315 = vld [vmem:[%s5 + $0x1e8] sm:$0xff]
        %v1316 = vld [vmem:[%s5 + $0x1f0] sm:$0xff]
        %v1317 = vld [vmem:[%s5 + $0x1f8] sm:$0xff]
        %v1318 = vld [vmem:[%s5 + $0x200] sm:$0xff]
        %v1319 = vld [vmem:[%s5 + $0x208] sm:$0xff]
        %v1320 = vld [vmem:[%s5 + $0x210] sm:$0xff]
        %v1321 = vld [vmem:[%s5 + $0x218] sm:$0xff]
        %v1322 = vld [vmem:[%s5 + $0x220] sm:$0xff]
        %v1323 = vld [vmem:[%s5 + $0x228] sm:$0xff]
        %v1324 = vld [vmem:[%s5 + $0x230] sm:$0xff]
        %v1325 = vld [vmem:[%s5 + $0x238] sm:$0xff]
        %v1326 = vld [vmem:[%s5 + $0x240] sm:$0xff]
        %v1327 = vld [vmem:[%s5 + $0x248] sm:$0xff]
        %v1328 = vld [vmem:[%s5 + $0x250] sm:$0xff]
        %v1329 = vld [vmem:[%s5 + $0x258] sm:$0xff]
        %v1330 = vld [vmem:[%s5 + $0x260] sm:$0xff]
        %v1331 = vld [vmem:[%s5 + $0x268] sm:$0xff]
        %v1332 = vld [vmem:[%s5 + $0x270] sm:$0xff]
        %v1333 = vld [vmem:[%s5 + $0x278] sm:$0xff]
        %v1334 = vld [vmem:[%s5 + $0x280] sm:$0xff]
        %v1335 = vld [vmem:[%s5 + $0x288] sm:$0xff]
        %v1336 = vld [vmem:[%s5 + $0x290] sm:$0xff]
        %v1337 = vld [vmem:[%s5 + $0x298] sm:$0xff]
        %v1338 = vld [vmem:[%s5 + $0x2a0] sm:$0xff]
        %v1339 = vld [vmem:[%s5 + $0x2a8] sm:$0xff]
        %v1340 = vld [vmem:[%s5 + $0x2b0] sm:$0xff]
        %v1341 = vld [vmem:[%s5 + $0x2b8] sm:$0xff]
        %v1342 = vld [vmem:[%s5 + $0x2c0] sm:$0xff]
        %v1343 = vld [vmem:[%s5 + $0x2c8] sm:$0xff]
        %v1344 = vld [vmem:[%s5 + $0x2d0] sm:$0xff]
        %v1345 = vld [vmem:[%s5 + $0x2d8] sm:$0xff]
        %v1346 = vld [vmem:[%s5 + $0x2e0] sm:$0xff]
        %v1347 = vld [vmem:[%s5 + $0x2e8] sm:$0xff]
        %v1348 = vld [vmem:[%s5 + $0x2f0] sm:$0xff]
        %v1349 = vld [vmem:[%s5 + $0x2f8] sm:$0xff]
        %v1350 = vld [vmem:[%s5 + $0x300] sm:$0xff]
        %v1351 = vld [vmem:[%s5 + $0x308] sm:$0xff]
        %v1352 = vld [vmem:[%s5 + $0x310] sm:$0xff]
        %v1353 = vld [vmem:[%s5 + $0x318] sm:$0xff]
        %v1354 = vld [vmem:[%s5 + $0x320] sm:$0xff]
        %v1355 = vld [vmem:[%s5 + $0x328] sm:$0xff]
        %v1356 = vld [vmem:[%s5 + $0x330] sm:$0xff]
        %v1357 = vld [vmem:[%s5 + $0x338] sm:$0xff]
        %v1358 = vld [vmem:[%s5 + $0x340] sm:$0xf]
        %v1359 = vld [vmem:[%s5 + $0x348] sm:$0xf]
        %v1360 = vld [vmem:[%s6] sm:$0x3]
        %v1362 = vlaneseq
        %v1363 = vshrl.u32 %v1362, 7
        %v1364 = vsub.s32 0, %v1363
        %v1365 = vrot.slane %v1360, %v1364
        %v1366 = vlaneseq
        %v1367 = vshrl.u32 %v1366, 7
        %v1368 = vsub.s32 1, %v1367
        %v1369 = vrot.slane %v1360, %v1368
        %vm1372 = vcmask 293888
        %v1373 = vsel %vm1372, %v1241, 0
        %v1375 = vsel %vm1372, %v1245, 0
        %v1378 = vsel %vm560, %v1358, 0
        %v1381 = vsel %vm560, %v1359, 0
        %1383 = vmatprep.subr.mxu0 %v1255
        %1384 = vmatpush1.msra.mxu0 %v1254
        %1385 = vmatprep.subr.mxu0 %v1257
        %1386 = vmatpush1.msra.mxu0 %v1256
        %1387 = vmatprep.subr.mxu0 %v1259
        %1388 = vmatpush1.msra.mxu0 %v1258
        %1389 = vmatprep.subr.mxu0 %v1261
        %1390 = vmatpush1.msra.mxu0 %v1260
        %1391 = vmatprep.subr.mxu0 %v1263
        %1392 = vmatpush1.msra.mxu0 %v1262
        %1393 = vmatprep.subr.mxu0 %v1265
        %1394 = vmatpush1.msra.mxu0 %v1264
        %1395 = vmatprep.subr.mxu0 %v1267
        %1396 = vmatpush1.msra.mxu0 %v1266
        %1397 = vmatprep.subr.mxu0 %v1269
        %1398 = vmatpush1.msra.mxu0 %v1268
        %1399 = vmatprep.subr.mxu0 %v1271
        %1400 = vmatpush1.msra.mxu0 %v1270
        %1401 = vmatprep.subr.mxu0 %v1273
        %1402 = vmatpush1.msra.mxu0 %v1272
        %1403 = vmatprep.subr.mxu0 %v1275
        %1404 = vmatpush1.msra.mxu0 %v1274
        %1405 = vmatprep.subr.mxu0 %v1277
        %1406 = vmatpush1.msra.mxu0 %v1276
        %1407 = vmatprep.subr.mxu0 %v1279
        %1408 = vmatpush1.msra.mxu0 %v1278
        %1409 = vmatprep.subr.mxu0 %v1281
        %1410 = vmatpush1.msra.mxu0 %v1280
        %1411 = vmatprep.subr.mxu0 %v1283
        %1412 = vmatpush1.msra.mxu0 %v1282
        %1413 = vmatprep.subr.mxu0 %v1285
        %1414 = vmatpush1.msra.mxu0 %v1284
        %1415 = vmatprep.subr.mxu0 %v1287
        %1416 = vmatpush1.msra.mxu0 %v1286
        %1417 = vmatprep.subr.mxu0 %v1289
        %1418 = vmatpush1.msra.mxu0 %v1288
        %1419 = vmatprep.subr.mxu0 %v1291
        %1420 = vmatpush1.msra.mxu0 %v1290
        %1421 = vmatprep.subr.mxu0 %v1293
        %1422 = vmatpush1.msra.mxu0 %v1292
        %1423 = vmatprep.subr.mxu0 %v1295
        %1424 = vmatpush1.msra.mxu0 %v1294
        %1425 = vmatprep.subr.mxu0 %v1297
        %1426 = vmatpush1.msra.mxu0 %v1296
        %1427 = vmatprep.subr.mxu0 %v1299
        %1428 = vmatpush1.msra.mxu0 %v1298
        %1429 = vmatprep.subr.mxu0 %v1301
        %1430 = vmatpush1.msra.mxu0 %v1300
        %1431 = vmatprep.subr.mxu0 %v1303
        %1432 = vmatpush1.msra.mxu0 %v1302
        %1433 = vmatprep.subr.mxu0 %v1305
        %1434 = vmatpush1.msra.mxu0 %v1304
        %1435 = vmatprep.subr.mxu0 %v1307
        %1436 = vmatpush1.msra.mxu0 %v1306
        %1437 = vmatprep.subr.mxu0 %v1309
        %1438 = vmatpush1.msra.mxu0 %v1308
        %1439 = vmatprep.subr.mxu0 %v1311
        %1440 = vmatpush1.msra.mxu0 %v1310
        %1441 = vmatprep.subr.mxu0 %v1313
        %1442 = vmatpush1.msra.mxu0 %v1312
        %1443 = vmatprep.subr.mxu0 %v1315
        %1444 = vmatpush1.msra.mxu0 %v1314
        %1445 = vmatprep.subr.mxu0 %v1317
        %1446 = vmatpush1.msra.mxu0 %v1316
        %1447 = vmatprep.mubr.f32.mxu0 %v1252
        %1448 = vmatmul.mubr.f32.gmra.mrb[0].mxu0 %v1103
        %v1449 = vpop.f32.mrb[0].mxu0
        %v1450 = vadd.f32 %v1365, %v1449
        %v1451 = vpop.f32.mrb[0].mxu0
        %v1452 = vadd.f32 %v1369, %v1451
        %1453 = vmatprep.mubr.f32.mxu0 %v1253
        %1454 = vmatmul.mubr.f32.gmra.mrb[0].mxu0 %v1104
        %v1455 = vpop.f32.mrb[0].mxu0
        %v1456 = vadd.f32 %v1365, %v1455
        %v1457 = vpop.f32.mrb[0].mxu0
        %v1458 = vadd.f32 %v1369, %v1457
        %1459 = vdwg.mxu0
        %1460 = vmatprep.subr.mxu0 %v1319
        %1461 = vmatpush1.msra.mxu0 %v1318
        %1462 = vmatprep.subr.mxu0 %v1321
        %1463 = vmatpush1.msra.mxu0 %v1320
        %1464 = vmatprep.subr.mxu0 %v1323
        %1465 = vmatpush1.msra.mxu0 %v1322
        %1466 = vmatprep.subr.mxu0 %v1325
        %1467 = vmatpush1.msra.mxu0 %v1324
        %1468 = vmatprep.subr.mxu0 %v1327
        %1469 = vmatpush1.msra.mxu0 %v1326
        %1470 = vmatprep.subr.mxu0 %v1329
        %1471 = vmatpush1.msra.mxu0 %v1328
        %1472 = vmatprep.subr.mxu0 %v1331
        %1473 = vmatpush1.msra.mxu0 %v1330
        %1474 = vmatprep.subr.mxu0 %v1333
        %1475 = vmatpush1.msra.mxu0 %v1332
        %1476 = vmatprep.subr.mxu0 %v1335
        %1477 = vmatpush1.msra.mxu0 %v1334
        %1478 = vmatprep.subr.mxu0 %v1337
        %1479 = vmatpush1.msra.mxu0 %v1336
        %1480 = vmatprep.subr.mxu0 %v1339
        %1481 = vmatpush1.msra.mxu0 %v1338
        %1482 = vmatprep.subr.mxu0 %v1341
        %1483 = vmatpush1.msra.mxu0 %v1340
        %1484 = vmatprep.subr.mxu0 %v1343
        %1485 = vmatpush1.msra.mxu0 %v1342
        %1486 = vmatprep.subr.mxu0 %v1345
        %1487 = vmatpush1.msra.mxu0 %v1344
        %1488 = vmatprep.subr.mxu0 %v1347
        %1489 = vmatpush1.msra.mxu0 %v1346
        %1490 = vmatprep.subr.mxu0 %v1349
        %1491 = vmatpush1.msra.mxu0 %v1348
        %1492 = vmatprep.subr.mxu0 %v1351
        %1493 = vmatpush1.msra.mxu0 %v1350
        %1494 = vmatprep.subr.mxu0 %v1353
        %1495 = vmatpush1.msra.mxu0 %v1352
        %1496 = vmatprep.subr.mxu0 %v1355
        %1497 = vmatpush1.msra.mxu0 %v1354
        %1498 = vmatprep.subr.mxu0 %v1357
        %1499 = vmatpush1.msra.mxu0 %v1356
        %1500 = vmatprep.subr.mxu0 %v1381
        %1501 = vmatpush1.msra.mxu0 %v1378
        %1502 = vmatprep.subr.mxu0 0.0
        %1503 = vmatpush1.msra.mxu0 0.0
        %1504 = vmatprep.subr.mxu0 0.0
        %1505 = vmatpush1.msra.mxu0 0.0
        %1506 = vmatprep.subr.mxu0 0.0
        %1507 = vmatpush1.msra.mxu0 0.0
        %1508 = vmatprep.subr.mxu0 0.0
        %1509 = vmatpush1.msra.mxu0 0.0
        %1510 = vmatprep.subr.mxu0 0.0
        %1511 = vmatpush1.msra.mxu0 0.0
        %1512 = vmatprep.subr.mxu0 0.0
        %1513 = vmatpush1.msra.mxu0 0.0
        %1514 = vmatprep.subr.mxu0 0.0
        %1515 = vmatpush1.msra.mxu0 0.0
        %1516 = vmatprep.subr.mxu0 0.0
        %1517 = vmatpush1.msra.mxu0 0.0
        %1518 = vmatprep.subr.mxu0 0.0
        %1519 = vmatpush1.msra.mxu0 0.0
        %1520 = vmatprep.subr.mxu0 0.0
        %1521 = vmatpush1.msra.mxu0 0.0
        %1522 = vmatprep.subr.mxu0 0.0
        %1523 = vmatpush1.msra.mxu0 0.0
        %1524 = vmatprep.mubr.f32.mxu0 %v1373
        %1525 = vmatmul.mubr.f32.gmra.mrb[0].mxu0 %v1246
        %v1526 = vpop.f32.mrb[0].mxu0
        %v1527 = vadd.f32 %v1450, %v1526
        %v1528 = vpop.f32.mrb[0].mxu0
        %v1529 = vadd.f32 %v1452, %v1528
        %1530 = vmatprep.mubr.f32.mxu0 %v1375
        %1531 = vmatmul.mubr.f32.gmra.mrb[0].mxu0 %v1247
        %v1532 = vpop.f32.mrb[0].mxu0
        %v1533 = vadd.f32 %v1456, %v1532
        %v1534 = vpop.f32.mrb[0].mxu0
        %v1535 = vadd.f32 %v1458, %v1534
        %1536 = vdwg.mxu0
        %v1537 = vsub.f32 0.0, %v1527
        %v1538 = vsub.f32 0.0, %v1529
        %v1539 = vsub.f32 0.0, %v1533
        %v1540 = vsub.f32 0.0, %v1535
        %v1541 = vmul.f32 %v1537, 1.442695
        %v1542 = vpow.pop %v1541
        %v1543 = vmul.f32 %v1538, 1.442695
        %v1544 = vpow.pop %v1543
        %v1545 = vmul.f32 %v1539, 1.442695
        %v1546 = vpow.pop %v1545
        %v1547 = vmul.f32 %v1540, 1.442695
        %v1548 = vpow.pop %v1547
        %v1549 = vadd.f32 %v1542, 1.0
        %v1550 = vadd.f32 %v1544, 1.0
        %v1551 = vadd.f32 %v1546, 1.0
        %v1552 = vadd.f32 %v1548, 1.0
        %v1553 = vrcp.pop %v1549
        %v1554 = vmul.f32 1.0, %v1553
        %v1555 = vrcp.pop %v1550
        %v1556 = vmul.f32 1.0, %v1555
        %v1557 = vrcp.pop %v1551
        %v1558 = vmul.f32 1.0, %v1557
        %v1559 = vrcp.pop %v1552
        %v1560 = vmul.f32 1.0, %v1559
        %v1561 = vld [vmem:[%s7] sm:$0x1f]
        %vm1562 = vcmask 80896
        %v1564 = vsel %vm1562, %v1561, 0
        %vm1566 = vcmask 1041408
        %v1568 = vsel %vm1566, %v1558, 0
        %v1571 = vsel %vm1566, %v1560, 0
        %1573 = vmatprep.subr.mxu0 %v1556
        %1574 = vmatpush1.msra.mxu0 %v1554
        %1575 = vmatprep.subr.mxu0 %v1571
        %1576 = vmatpush1.msra.mxu0 %v1568
        %1577 = vmatprep.subr.mxu0 0.0
        %1578 = vmatpush1.msra.mxu0 0.0
        %1579 = vmatprep.subr.mxu0 0.0
        %1580 = vmatpush1.msra.mxu0 0.0
        %1581 = vmatprep.subr.mxu0 0.0
        %1582 = vmatpush1.msra.mxu0 0.0
        %1583 = vmatprep.subr.mxu0 0.0
        %1584 = vmatpush1.msra.mxu0 0.0
        %1585 = vmatprep.subr.mxu0 0.0
        %1586 = vmatpush1.msra.mxu0 0.0
        %1587 = vmatprep.subr.mxu0 0.0
        %1588 = vmatpush1.msra.mxu0 0.0
        %1589 = vmatprep.subr.mxu0 0.0
        %1590 = vmatpush1.msra.mxu0 0.0
        %1591 = vmatprep.subr.mxu0 0.0
        %1592 = vmatpush1.msra.mxu0 0.0
        %1593 = vmatprep.subr.mxu0 0.0
        %1594 = vmatpush1.msra.mxu0 0.0
        %1595 = vmatprep.subr.mxu0 0.0
        %1596 = vmatpush1.msra.mxu0 0.0
        %1597 = vmatprep.subr.mxu0 0.0
        %1598 = vmatpush1.msra.mxu0 0.0
        %1599 = vmatprep.subr.mxu0 0.0
        %1600 = vmatpush1.msra.mxu0 0.0
        %1601 = vmatprep.subr.mxu0 0.0
        %1602 = vmatpush1.msra.mxu0 0.0
        %1603 = vmatprep.subr.mxu0 0.0
        %1604 = vmatpush1.msra.mxu0 0.0
        %1605 = vmatprep.subr.mxu0 0.0
        %1606 = vmatpush1.msra.mxu0 0.0
        %1607 = vmatprep.subr.mxu0 0.0
        %1608 = vmatpush1.msra.mxu0 0.0
        %1609 = vmatprep.subr.mxu0 0.0
        %1610 = vmatpush1.msra.mxu0 0.0
        %1611 = vmatprep.subr.mxu0 0.0
        %1612 = vmatpush1.msra.mxu0 0.0
        %1613 = vmatprep.subr.mxu0 0.0
        %1614 = vmatpush1.msra.mxu0 0.0
        %1615 = vmatprep.subr.mxu0 0.0
        %1616 = vmatpush1.msra.mxu0 0.0
        %1617 = vmatprep.subr.mxu0 0.0
        %1618 = vmatpush1.msra.mxu0 0.0
        %1619 = vmatprep.subr.mxu0 0.0
        %1620 = vmatpush1.msra.mxu0 0.0
        %1621 = vmatprep.subr.mxu0 0.0
        %1622 = vmatpush1.msra.mxu0 0.0
        %1623 = vmatprep.subr.mxu0 0.0
        %1624 = vmatpush1.msra.mxu0 0.0
        %1625 = vmatprep.subr.mxu0 0.0
        %1626 = vmatpush1.msra.mxu0 0.0
        %1627 = vmatprep.subr.mxu0 0.0
        %1628 = vmatpush1.msra.mxu0 0.0
        %1629 = vmatprep.subr.mxu0 0.0
        %1630 = vmatpush1.msra.mxu0 0.0
        %1631 = vmatprep.subr.mxu0 0.0
        %1632 = vmatpush1.msra.mxu0 0.0
        %1633 = vmatprep.subr.mxu0 0.0
        %1634 = vmatpush1.msra.mxu0 0.0
        %1635 = vmatprep.subr.mxu0 0.0
        %1636 = vmatpush1.msra.mxu0 0.0
        %1637 = vmatprep.mubr.f32.mxu0 0.0
        %1638 = vmatmul.mubr.f32.gmra.mrb[0].mxu0 %v1564
        %v1639 = vpop.f32.mrb[0].mxu0
        %v1640 = vadd.f32 0.0, %v1639
        %v1641 = vpop.f32.mrb[0].mxu0
        %v1642 = vadd.f32 0.0, %v1641
        %1643 = vdwg.mxu0
        %v1644 = vld [vmem:[%s8] sm:$0xff]
        %v1645 = vld [vmem:[%s8 + $0x8] sm:$0xff]
        %v1646 = vld [vmem:[%s8 + $0x10] sm:$0xff]
        %v1647 = vld [vmem:[%s8 + $0x18] sm:$0xff]
        %v1648 = vld [vmem:[%s8 + $0x20] sm:$0xff]
        %v1649 = vld [vmem:[%s8 + $0x28] sm:$0xff]
        %v1650 = vld [vmem:[%s8 + $0x30] sm:$0xff]
        %v1651 = vld [vmem:[%s8 + $0x38] sm:$0xff]
        %v1652 = vld [vmem:[%s8 + $0x40] sm:$0xff]
        %v1653 = vld [vmem:[%s8 + $0x48] sm:$0xff]
        %v1654 = vld [vmem:[%s8 + $0x50] sm:$0xff]
        %v1655 = vld [vmem:[%s8 + $0x58] sm:$0xff]
        %v1656 = vld [vmem:[%s8 + $0x60] sm:$0xff]
        %v1657 = vld [vmem:[%s8 + $0x68] sm:$0xff]
        %v1658 = vld [vmem:[%s8 + $0x70] sm:$0xff]
        %v1659 = vld [vmem:[%s8 + $0x78] sm:$0xff]
        %v1660 = vld [vmem:[%s8 + $0x80] sm:$0xff]
        %v1661 = vld [vmem:[%s8 + $0x88] sm:$0xff]
        %v1662 = vld [vmem:[%s8 + $0x90] sm:$0xff]
        %v1663 = vld [vmem:[%s8 + $0x98] sm:$0xff]
        %v1665 = vsel %vm568, %v1642, 0
        %1667 = vmatprep.subr.mxu0 0.0
        %1668 = vmatpush1.msra.mxu0 %v1644
        %1669 = vmatprep.subr.mxu0 0.0
        %1670 = vmatpush1.msra.mxu0 %v1645
        %1671 = vmatprep.subr.mxu0 0.0
        %1672 = vmatpush1.msra.mxu0 %v1646
        %1673 = vmatprep.subr.mxu0 0.0
        %1674 = vmatpush1.msra.mxu0 %v1647
        %1675 = vmatprep.subr.mxu0 0.0
        %1676 = vmatpush1.msra.mxu0 %v1648
        %1677 = vmatprep.subr.mxu0 0.0
        %1678 = vmatpush1.msra.mxu0 %v1649
        %1679 = vmatprep.subr.mxu0 0.0
        %1680 = vmatpush1.msra.mxu0 %v1650
        %1681 = vmatprep.subr.mxu0 0.0
        %1682 = vmatpush1.msra.mxu0 %v1651
        %1683 = vmatprep.subr.mxu0 0.0
        %1684 = vmatpush1.msra.mxu0 %v1652
        %1685 = vmatprep.subr.mxu0 0.0
        %1686 = vmatpush1.msra.mxu0 %v1653
        %1687 = vmatprep.subr.mxu0 0.0
        %1688 = vmatpush1.msra.mxu0 %v1654
        %1689 = vmatprep.subr.mxu0 0.0
        %1690 = vmatpush1.msra.mxu0 %v1655
        %1691 = vmatprep.subr.mxu0 0.0
        %1692 = vmatpush1.msra.mxu0 %v1656
        %1693 = vmatprep.subr.mxu0 0.0
        %1694 = vmatpush1.msra.mxu0 %v1657
        %1695 = vmatprep.subr.mxu0 0.0
        %1696 = vmatpush1.msra.mxu0 %v1658
        %1697 = vmatprep.subr.mxu0 0.0
        %1698 = vmatpush1.msra.mxu0 %v1659
        %1699 = vmatprep.subr.mxu0 0.0
        %1700 = vmatpush1.msra.mxu0 %v1660
        %1701 = vmatprep.subr.mxu0 0.0
        %1702 = vmatpush1.msra.mxu0 %v1661
        %1703 = vmatprep.subr.mxu0 0.0
        %1704 = vmatpush1.msra.mxu0 %v1662
        %1705 = vmatprep.subr.mxu0 0.0
        %1706 = vmatpush1.msra.mxu0 %v1663
        %1707 = vmatprep.subr.mxu0 0.0
        %1708 = vmatpush1.msra.mxu0 0.0
        %1709 = vmatprep.subr.mxu0 0.0
        %1710 = vmatpush1.msra.mxu0 0.0
        %1711 = vmatprep.subr.mxu0 0.0
        %1712 = vmatpush1.msra.mxu0 0.0
        %1713 = vmatprep.subr.mxu0 0.0
        %1714 = vmatpush1.msra.mxu0 0.0
        %1715 = vmatprep.subr.mxu0 0.0
        %1716 = vmatpush1.msra.mxu0 0.0
        %1717 = vmatprep.subr.mxu0 0.0
        %1718 = vmatpush1.msra.mxu0 0.0
        %1719 = vmatprep.subr.mxu0 0.0
        %1720 = vmatpush1.msra.mxu0 0.0
        %1721 = vmatprep.subr.mxu0 0.0
        %1722 = vmatpush1.msra.mxu0 0.0
        %1723 = vmatprep.subr.mxu0 0.0
        %1724 = vmatpush1.msra.mxu0 0.0
        %1725 = vmatprep.subr.mxu0 0.0
        %1726 = vmatpush1.msra.mxu0 0.0
        %1727 = vmatprep.subr.mxu0 0.0
        %1728 = vmatpush1.msra.mxu0 0.0
        %1729 = vmatprep.subr.mxu0 0.0
        %1730 = vmatpush1.msra.mxu0 0.0
        %1731 = vmatprep.mubr.f32.mxu0 %v1665
        %1732 = vmatmul.mubr.f32.gmra.mrb[0].mxu0 %v1640
        %v1733 = vpop.f32.mrb[0].mxu0
        %v1734 = vadd.f32 0.0, %v1733
        %v1735 = vpop.f32.mrb[0].mxu0
        %1736 = vdwg.mxu0
        %v1738 = vrot.slane %v1734, 1
        %1739 = vrot.lane.b32.xlu0 %v1738, 80
        %v1740 = vpop.permute.xlu0 %1739
        %v1742 = vrot.slane %v1734, 2
        %1743 = vrot.lane.b32.xlu0 %v1742, 32
        %v1744 = vpop.permute.xlu0 %1743
        %v1746 = vrot.slane %v1734, 3
        %1747 = vrot.lane.b32.xlu0 %v1746, 112
        %v1748 = vpop.permute.xlu0 %1747
        %v1750 = vrot.slane %v1734, 4
        %1751 = vrot.lane.b32.xlu0 %v1750, 64
        %v1752 = vpop.permute.xlu0 %1751
        %vm1754 = vcmask 654336
        %v1755 = vsel %vm1754, %v1734, %v1740
        %v1756 = vsel %vm568, %v1740, %v1744
        %v1757 = vsel %vm1099, %v1756, %v1748
        %v1758 = vsel %vm573, %v1748, %v1752
        %v1759 = vld [vmem:[%s9] sm:$0xff]
        %v1760 = vld [vmem:[%s9 + $0x8] sm:$0xff]
        %v1761 = vld [vmem:[%s9 + $0x10] sm:$0xff]
        %v1762 = vld [vmem:[%s9 + $0x18] sm:$0xff]
        %v1763 = vld [vmem:[%s9 + $0x20] sm:$0xff]
        %v1764 = vld [vmem:[%s9 + $0x28] sm:$0xff]
        %v1765 = vld [vmem:[%s9 + $0x30] sm:$0xff]
        %v1766 = vld [vmem:[%s9 + $0x38] sm:$0xff]
        %v1767 = vld [vmem:[%s9 + $0x40] sm:$0xff]
        %v1768 = vld [vmem:[%s9 + $0x48] sm:$0xff]
        %v1769 = vld [vmem:[%s9 + $0x50] sm:$0xff]
        %v1770 = vld [vmem:[%s9 + $0x58] sm:$0xff]
        %v1771 = vld [vmem:[%s9 + $0x60] sm:$0xff]
        %v1772 = vld [vmem:[%s9 + $0x68] sm:$0xff]
        %v1773 = vld [vmem:[%s9 + $0x70] sm:$0xff]
        %v1774 = vld [vmem:[%s9 + $0x78] sm:$0xff]
        %v1775 = vld [vmem:[%s9 + $0x80] sm:$0xff]
        %v1776 = vld [vmem:[%s9 + $0x88] sm:$0xff]
        %v1777 = vld [vmem:[%s9 + $0x90] sm:$0xff]
        %v1778 = vld [vmem:[%s9 + $0x98] sm:$0xff]
        %v1779 = vld [vmem:[%s9 + $0xa0] sm:$0xff]
        %v1780 = vld [vmem:[%s9 + $0xa8] sm:$0xff]
        %v1781 = vld [vmem:[%s9 + $0xb0] sm:$0xff]
        %v1782 = vld [vmem:[%s9 + $0xb8] sm:$0xff]
        %v1783 = vld [vmem:[%s9 + $0xc0] sm:$0xff]
        %v1784 = vld [vmem:[%s9 + $0xc8] sm:$0xff]
        %v1785 = vld [vmem:[%s9 + $0xd0] sm:$0xff]
        %v1786 = vld [vmem:[%s9 + $0xd8] sm:$0xff]
        %v1787 = vld [vmem:[%s9 + $0xe0] sm:$0xff]
        %v1788 = vld [vmem:[%s9 + $0xe8] sm:$0xff]
        %v1789 = vld [vmem:[%s9 + $0xf0] sm:$0xff]
        %v1790 = vld [vmem:[%s9 + $0xf8] sm:$0xff]
        %v1791 = vld [vmem:[%s9 + $0x100] sm:$0xff]
        %v1792 = vld [vmem:[%s9 + $0x108] sm:$0xff]
        %v1793 = vld [vmem:[%s9 + $0x110] sm:$0xff]
        %v1794 = vld [vmem:[%s9 + $0x118] sm:$0xff]
        %v1795 = vld [vmem:[%s9 + $0x120] sm:$0xff]
        %v1796 = vld [vmem:[%s9 + $0x128] sm:$0xff]
        %v1797 = vld [vmem:[%s9 + $0x130] sm:$0xff]
        %v1798 = vld [vmem:[%s9 + $0x138] sm:$0xff]
        %v1799 = vld [vmem:[%s9 + $0x140] sm:$0xff]
        %v1800 = vld [vmem:[%s9 + $0x148] sm:$0xff]
        %v1801 = vld [vmem:[%s9 + $0x150] sm:$0xff]
        %v1802 = vld [vmem:[%s9 + $0x158] sm:$0xff]
        %v1803 = vld [vmem:[%s9 + $0x160] sm:$0xff]
        %v1804 = vld [vmem:[%s9 + $0x168] sm:$0xff]
        %v1805 = vld [vmem:[%s9 + $0x170] sm:$0xff]
        %v1806 = vld [vmem:[%s9 + $0x178] sm:$0xff]
        %v1807 = vld [vmem:[%s9 + $0x180] sm:$0xff]
        %v1808 = vld [vmem:[%s9 + $0x188] sm:$0xff]
        %v1809 = vld [vmem:[%s10] sm:$0x1]
        %vm1810 = vcmask 130048
        %v1811 = vsel %vm1810, %v1752, 0
        %1813 = vmatprep.subr.mxu0 0.0
        %1814 = vmatpush1.msra.mxu0 %v1759
        %1815 = vmatprep.subr.mxu0 0.0
        %1816 = vmatpush1.msra.mxu0 %v1760
        %1817 = vmatprep.subr.mxu0 0.0
        %1818 = vmatpush1.msra.mxu0 %v1761
        %1819 = vmatprep.subr.mxu0 0.0
        %1820 = vmatpush1.msra.mxu0 %v1762
        %1821 = vmatprep.subr.mxu0 0.0
        %1822 = vmatpush1.msra.mxu0 %v1763
        %1823 = vmatprep.subr.mxu0 0.0
        %1824 = vmatpush1.msra.mxu0 %v1764
        %1825 = vmatprep.subr.mxu0 0.0
        %1826 = vmatpush1.msra.mxu0 %v1765
        %1827 = vmatprep.subr.mxu0 0.0
        %1828 = vmatpush1.msra.mxu0 %v1766
        %1829 = vmatprep.subr.mxu0 0.0
        %1830 = vmatpush1.msra.mxu0 %v1767
        %1831 = vmatprep.subr.mxu0 0.0
        %1832 = vmatpush1.msra.mxu0 %v1768
        %1833 = vmatprep.subr.mxu0 0.0
        %1834 = vmatpush1.msra.mxu0 %v1769
        %1835 = vmatprep.subr.mxu0 0.0
        %1836 = vmatpush1.msra.mxu0 %v1770
        %1837 = vmatprep.subr.mxu0 0.0
        %1838 = vmatpush1.msra.mxu0 %v1771
        %1839 = vmatprep.subr.mxu0 0.0
        %1840 = vmatpush1.msra.mxu0 %v1772
        %1841 = vmatprep.subr.mxu0 0.0
        %1842 = vmatpush1.msra.mxu0 %v1773
        %1843 = vmatprep.subr.mxu0 0.0
        %1844 = vmatpush1.msra.mxu0 %v1774
        %1845 = vmatprep.subr.mxu0 0.0
        %1846 = vmatpush1.msra.mxu0 %v1775
        %1847 = vmatprep.subr.mxu0 0.0
        %1848 = vmatpush1.msra.mxu0 %v1776
        %1849 = vmatprep.subr.mxu0 0.0
        %1850 = vmatpush1.msra.mxu0 %v1777
        %1851 = vmatprep.subr.mxu0 0.0
        %1852 = vmatpush1.msra.mxu0 %v1778
        %1853 = vmatprep.subr.mxu0 0.0
        %1854 = vmatpush1.msra.mxu0 %v1779
        %1855 = vmatprep.subr.mxu0 0.0
        %1856 = vmatpush1.msra.mxu0 %v1780
        %1857 = vmatprep.subr.mxu0 0.0
        %1858 = vmatpush1.msra.mxu0 %v1781
        %1859 = vmatprep.subr.mxu0 0.0
        %1860 = vmatpush1.msra.mxu0 %v1782
        %1861 = vmatprep.subr.mxu0 0.0
        %1862 = vmatpush1.msra.mxu0 %v1783
        %1863 = vmatprep.subr.mxu0 0.0
        %1864 = vmatpush1.msra.mxu0 %v1784
        %1865 = vmatprep.subr.mxu0 0.0
        %1866 = vmatpush1.msra.mxu0 %v1785
        %1867 = vmatprep.subr.mxu0 0.0
        %1868 = vmatpush1.msra.mxu0 %v1786
        %1869 = vmatprep.subr.mxu0 0.0
        %1870 = vmatpush1.msra.mxu0 %v1787
        %1871 = vmatprep.subr.mxu0 0.0
        %1872 = vmatpush1.msra.mxu0 %v1788
        %1873 = vmatprep.subr.mxu0 0.0
        %1874 = vmatpush1.msra.mxu0 %v1789
        %1875 = vmatprep.subr.mxu0 0.0
        %1876 = vmatpush1.msra.mxu0 %v1790
        %1877 = vmatprep.mubr.f32.mxu0 %v1757
        %1878 = vmatmul.mubr.f32.gmra.mrb[0].mxu0 %v1755
        %v1879 = vpop.f32.mrb[0].mxu0
        %v1880 = vadd.f32 %v1809, %v1879
        %v1881 = vpop.f32.mrb[0].mxu0
        %1882 = vdwg.mxu0
        %1883 = vmatprep.subr.mxu0 0.0
        %1884 = vmatpush1.msra.mxu0 %v1791
        %1885 = vmatprep.subr.mxu0 0.0
        %1886 = vmatpush1.msra.mxu0 %v1792
        %1887 = vmatprep.subr.mxu0 0.0
        %1888 = vmatpush1.msra.mxu0 %v1793
        %1889 = vmatprep.subr.mxu0 0.0
        %1890 = vmatpush1.msra.mxu0 %v1794
        %1891 = vmatprep.subr.mxu0 0.0
        %1892 = vmatpush1.msra.mxu0 %v1795
        %1893 = vmatprep.subr.mxu0 0.0
        %1894 = vmatpush1.msra.mxu0 %v1796
        %1895 = vmatprep.subr.mxu0 0.0
        %1896 = vmatpush1.msra.mxu0 %v1797
        %1897 = vmatprep.subr.mxu0 0.0
        %1898 = vmatpush1.msra.mxu0 %v1798
        %1899 = vmatprep.subr.mxu0 0.0
        %1900 = vmatpush1.msra.mxu0 %v1799
        %1901 = vmatprep.subr.mxu0 0.0
        %1902 = vmatpush1.msra.mxu0 %v1800
        %1903 = vmatprep.subr.mxu0 0.0
        %1904 = vmatpush1.msra.mxu0 %v1801
        %1905 = vmatprep.subr.mxu0 0.0
        %1906 = vmatpush1.msra.mxu0 %v1802
        %1907 = vmatprep.subr.mxu0 0.0
        %1908 = vmatpush1.msra.mxu0 %v1803
        %1909 = vmatprep.subr.mxu0 0.0
        %1910 = vmatpush1.msra.mxu0 %v1804
        %1911 = vmatprep.subr.mxu0 0.0
        %1912 = vmatpush1.msra.mxu0 %v1805
        %1913 = vmatprep.subr.mxu0 0.0
        %1914 = vmatpush1.msra.mxu0 %v1806
        %1915 = vmatprep.subr.mxu0 0.0
        %1916 = vmatpush1.msra.mxu0 %v1807
        %1917 = vmatprep.subr.mxu0 0.0
        %1918 = vmatpush1.msra.mxu0 %v1808
        %1919 = vmatprep.subr.mxu0 0.0
        %1920 = vmatpush1.msra.mxu0 0.0
        %1921 = vmatprep.subr.mxu0 0.0
        %1922 = vmatpush1.msra.mxu0 0.0
        %1923 = vmatprep.subr.mxu0 0.0
        %1924 = vmatpush1.msra.mxu0 0.0
        %1925 = vmatprep.subr.mxu0 0.0
        %1926 = vmatpush1.msra.mxu0 0.0
        %1927 = vmatprep.subr.mxu0 0.0
        %1928 = vmatpush1.msra.mxu0 0.0
        %1929 = vmatprep.subr.mxu0 0.0
        %1930 = vmatpush1.msra.mxu0 0.0
        %1931 = vmatprep.subr.mxu0 0.0
        %1932 = vmatpush1.msra.mxu0 0.0
        %1933 = vmatprep.subr.mxu0 0.0
        %1934 = vmatpush1.msra.mxu0 0.0
        %1935 = vmatprep.subr.mxu0 0.0
        %1936 = vmatpush1.msra.mxu0 0.0
        %1937 = vmatprep.subr.mxu0 0.0
        %1938 = vmatpush1.msra.mxu0 0.0
        %1939 = vmatprep.subr.mxu0 0.0
        %1940 = vmatpush1.msra.mxu0 0.0
        %1941 = vmatprep.subr.mxu0 0.0
        %1942 = vmatpush1.msra.mxu0 0.0
        %1943 = vmatprep.subr.mxu0 0.0
        %1944 = vmatpush1.msra.mxu0 0.0
        %1945 = vmatprep.subr.mxu0 0.0
        %1946 = vmatpush1.msra.mxu0 0.0
        %1947 = vmatprep.mubr.f32.mxu0 %v1811
        %1948 = vmatmul.mubr.f32.gmra.mrb[0].mxu0 %v1758
        %v1949 = vpop.f32.mrb[0].mxu0
        %v1950 = vadd.f32 %v1880, %v1949
        %v1951 = vpop.f32.mrb[0].mxu0
        %1952 = vdwg.mxu0
        %v1953 = vsub.f32 0.0, %v1950
        %v1954 = vmul.f32 %v1953, 1.442695
        %v1955 = vpow.pop %v1954
        %v1956 = vadd.f32 %v1955, 1.0
        %v1957 = vrcp.pop %v1956
        %v1958 = vmul.f32 1.0, %v1957
        %v1959 = vld [vmem:[%s11] sm:$0xff]
        %v1960 = vld [vmem:[%s11 + $0x8] sm:$0xff]
        %v1961 = vld [vmem:[%s11 + $0x10] sm:$0xff]
        %v1962 = vld [vmem:[%s11 + $0x18] sm:$0xff]
        %v1963 = vld [vmem:[%s11 + $0x20] sm:$0xff]
        %v1964 = vld [vmem:[%s11 + $0x28] sm:$0xff]
        %v1965 = vld [vmem:[%s11 + $0x30] sm:$0xff]
        %v1966 = vld [vmem:[%s11 + $0x38] sm:$0xff]
        %v1967 = vld [vmem:[%s11 + $0x40] sm:$0xff]
        %v1968 = vld [vmem:[%s11 + $0x48] sm:$0xff]
        %v1969 = vld [vmem:[%s11 + $0x50] sm:$0xff]
        %v1970 = vld [vmem:[%s11 + $0x58] sm:$0xff]
        %v1971 = vld [vmem:[%s11 + $0x60] sm:$0xff]
        %v1972 = vld [vmem:[%s11 + $0x68] sm:$0xff]
        %v1973 = vld [vmem:[%s11 + $0x70] sm:$0xff]
        %v1974 = vld [vmem:[%s12] sm:$0x1]
        %vm1975 = vcmask 982016
        %v1977 = vsel %vm1975, %v1958, 0
        %1979 = vmatprep.subr.mxu0 0.0
        %1980 = vmatpush1.msra.mxu0 %v1959
        %1981 = vmatprep.subr.mxu0 0.0
        %1982 = vmatpush1.msra.mxu0 %v1960
        %1983 = vmatprep.subr.mxu0 0.0
        %1984 = vmatpush1.msra.mxu0 %v1961
        %1985 = vmatprep.subr.mxu0 0.0
        %1986 = vmatpush1.msra.mxu0 %v1962
        %1987 = vmatprep.subr.mxu0 0.0
        %1988 = vmatpush1.msra.mxu0 %v1963
        %1989 = vmatprep.subr.mxu0 0.0
        %1990 = vmatpush1.msra.mxu0 %v1964
        %1991 = vmatprep.subr.mxu0 0.0
        %1992 = vmatpush1.msra.mxu0 %v1965
        %1993 = vmatprep.subr.mxu0 0.0
        %1994 = vmatpush1.msra.mxu0 %v1966
        %1995 = vmatprep.subr.mxu0 0.0
        %1996 = vmatpush1.msra.mxu0 %v1967
        %1997 = vmatprep.subr.mxu0 0.0
        %1998 = vmatpush1.msra.mxu0 %v1968
        %1999 = vmatprep.subr.mxu0 0.0
        %2000 = vmatpush1.msra.mxu0 %v1969
        %2001 = vmatprep.subr.mxu0 0.0
        %2002 = vmatpush1.msra.mxu0 %v1970
        %2003 = vmatprep.subr.mxu0 0.0
        %2004 = vmatpush1.msra.mxu0 %v1971
        %2005 = vmatprep.subr.mxu0 0.0
        %2006 = vmatpush1.msra.mxu0 %v1972
        %2007 = vmatprep.subr.mxu0 0.0
        %2008 = vmatpush1.msra.mxu0 %v1973
        %2009 = vmatprep.subr.mxu0 0.0
        %2010 = vmatpush1.msra.mxu0 0.0
        %2011 = vmatprep.subr.mxu0 0.0
        %2012 = vmatpush1.msra.mxu0 0.0
        %2013 = vmatprep.subr.mxu0 0.0
        %2014 = vmatpush1.msra.mxu0 0.0
        %2015 = vmatprep.subr.mxu0 0.0
        %2016 = vmatpush1.msra.mxu0 0.0
        %2017 = vmatprep.subr.mxu0 0.0
        %2018 = vmatpush1.msra.mxu0 0.0
        %2019 = vmatprep.subr.mxu0 0.0
        %2020 = vmatpush1.msra.mxu0 0.0
        %2021 = vmatprep.subr.mxu0 0.0
        %2022 = vmatpush1.msra.mxu0 0.0
        %2023 = vmatprep.subr.mxu0 0.0
        %2024 = vmatpush1.msra.mxu0 0.0
        %2025 = vmatprep.subr.mxu0 0.0
        %2026 = vmatpush1.msra.mxu0 0.0
        %2027 = vmatprep.subr.mxu0 0.0
        %2028 = vmatpush1.msra.mxu0 0.0
        %2029 = vmatprep.subr.mxu0 0.0
        %2030 = vmatpush1.msra.mxu0 0.0
        %2031 = vmatprep.subr.mxu0 0.0
        %2032 = vmatpush1.msra.mxu0 0.0
        %2033 = vmatprep.subr.mxu0 0.0
        %2034 = vmatpush1.msra.mxu0 0.0
        %2035 = vmatprep.subr.mxu0 0.0
        %2036 = vmatpush1.msra.mxu0 0.0
        %2037 = vmatprep.subr.mxu0 0.0
        %2038 = vmatpush1.msra.mxu0 0.0
        %2039 = vmatprep.subr.mxu0 0.0
        %2040 = vmatpush1.msra.mxu0 0.0
        %2041 = vmatprep.subr.mxu0 0.0
        %2042 = vmatpush1.msra.mxu0 0.0
        %2043 = vmatprep.mubr.f32.mxu0 0.0
        %2044 = vmatmul.mubr.f32.gmra.mrb[0].mxu0 %v1977
        %v2045 = vpop.f32.mrb[0].mxu0
        %v2046 = vadd.f32 %v1974, %v2045
        %v2047 = vpop.f32.mrb[0].mxu0
        %2048 = vdwg.mxu0
        %v2049 = vsub.f32 0.0, %v2046
        %v2050 = vmul.f32 %v2049, 1.442695
        %v2051 = vpow.pop %v2050
        %v2052 = vadd.f32 %v2051, 1.0
        %v2053 = vrcp.pop %v2052
        %v2054 = vmul.f32 1.0, %v2053
        %v2055 = vld [vmem:[%s13] sm:$0xff]
        %v2056 = vld [vmem:[%s13 + $0x8] sm:$0xff]
        %v2057 = vld [vmem:[%s13 + $0x10] sm:$0xff]
        %v2058 = vld [vmem:[%s13 + $0x18] sm:$0xff]
        %v2059 = vld [vmem:[%s13 + $0x20] sm:$0xff]
        %v2060 = vld [vmem:[%s13 + $0x28] sm:$0xff]
        %v2061 = vld [vmem:[%s13 + $0x30] sm:$0xff]
        %v2062 = vld [vmem:[%s13 + $0x38] sm:$0xff]
        %v2063 = vld [vmem:[%s13 + $0x40] sm:$0xff]
        %v2064 = vld [vmem:[%s13 + $0x48] sm:$0xff]
        %v2065 = vld [vmem:[%s13 + $0x50] sm:$0xf]
        %v2066 = vld [vmem:[%s14] sm:$0x1]
        %v2068 = vsel %vm1093, %v2054, 0
        %v2071 = vsel %vm560, %v2065, 0
        %2073 = vmatprep.subr.mxu0 0.0
        %2074 = vmatpush1.msra.mxu0 %v2055
        %2075 = vmatprep.subr.mxu0 0.0
        %2076 = vmatpush1.msra.mxu0 %v2056
        %2077 = vmatprep.subr.mxu0 0.0
        %2078 = vmatpush1.msra.mxu0 %v2057
        %2079 = vmatprep.subr.mxu0 0.0
        %2080 = vmatpush1.msra.mxu0 %v2058
        %2081 = vmatprep.subr.mxu0 0.0
        %2082 = vmatpush1.msra.mxu0 %v2059
        %2083 = vmatprep.subr.mxu0 0.0
        %2084 = vmatpush1.msra.mxu0 %v2060
        %2085 = vmatprep.subr.mxu0 0.0
        %2086 = vmatpush1.msra.mxu0 %v2061
        %2087 = vmatprep.subr.mxu0 0.0
        %2088 = vmatpush1.msra.mxu0 %v2062
        %2089 = vmatprep.subr.mxu0 0.0
        %2090 = vmatpush1.msra.mxu0 %v2063
        %2091 = vmatprep.subr.mxu0 0.0
        %2092 = vmatpush1.msra.mxu0 %v2064
        %2093 = vmatprep.subr.mxu0 0.0
        %2094 = vmatpush1.msra.mxu0 %v2071
        %2095 = vmatprep.subr.mxu0 0.0
        %2096 = vmatpush1.msra.mxu0 0.0
        %2097 = vmatprep.subr.mxu0 0.0
        %2098 = vmatpush1.msra.mxu0 0.0
        %2099 = vmatprep.subr.mxu0 0.0
        %2100 = vmatpush1.msra.mxu0 0.0
        %2101 = vmatprep.subr.mxu0 0.0
        %2102 = vmatpush1.msra.mxu0 0.0
        %2103 = vmatprep.subr.mxu0 0.0
        %2104 = vmatpush1.msra.mxu0 0.0
        %2105 = vmatprep.subr.mxu0 0.0
        %2106 = vmatpush1.msra.mxu0 0.0
        %2107 = vmatprep.subr.mxu0 0.0
        %2108 = vmatpush1.msra.mxu0 0.0
        %2109 = vmatprep.subr.mxu0 0.0
        %2110 = vmatpush1.msra.mxu0 0.0
        %2111 = vmatprep.subr.mxu0 0.0
        %2112 = vmatpush1.msra.mxu0 0.0
        %2113 = vmatprep.subr.mxu0 0.0
        %2114 = vmatpush1.msra.mxu0 0.0
        %2115 = vmatprep.subr.mxu0 0.0
        %2116 = vmatpush1.msra.mxu0 0.0
        %2117 = vmatprep.subr.mxu0 0.0
        %2118 = vmatpush1.msra.mxu0 0.0
        %2119 = vmatprep.subr.mxu0 0.0
        %2120 = vmatpush1.msra.mxu0 0.0
        %2121 = vmatprep.subr.mxu0 0.0
        %2122 = vmatpush1.msra.mxu0 0.0
        %2123 = vmatprep.subr.mxu0 0.0
        %2124 = vmatpush1.msra.mxu0 0.0
        %2125 = vmatprep.subr.mxu0 0.0
        %2126 = vmatpush1.msra.mxu0 0.0
        %2127 = vmatprep.subr.mxu0 0.0
        %2128 = vmatpush1.msra.mxu0 0.0
        %2129 = vmatprep.subr.mxu0 0.0
        %2130 = vmatpush1.msra.mxu0 0.0
        %2131 = vmatprep.subr.mxu0 0.0
        %2132 = vmatpush1.msra.mxu0 0.0
        %2133 = vmatprep.subr.mxu0 0.0
        %2134 = vmatpush1.msra.mxu0 0.0
        %2135 = vmatprep.subr.mxu0 0.0
        %2136 = vmatpush1.msra.mxu0 0.0
        %2137 = vmatprep.mubr.f32.mxu0 0.0
        %2138 = vmatmul.mubr.f32.gmra.mrb[0].mxu0 %v2068
        %v2139 = vpop.f32.mrb[0].mxu0
        %v2140 = vadd.f32 %v2066, %v2139
        %v2141 = vpop.f32.mrb[0].mxu0
        %2142 = vdwg.mxu0
        %vm2143 = vcmask 73728
        %2144 = vst.msk [vmem:[%s486] sm:$0x1] %vm2143, %v2140
        %s2145 = sand.u32 %s357, 1
        %s2146 = scalar_lea.sflag [#allocation3], %s2145
        %s2147 = sand.u32 %s357, 1
        %s2148 = scalar_lea.vmem [#allocation2], %s2147
        // Predicated region
        $region81: #{forward.1} parent=79 // pred_check
          %p2149 = pneg %p367
        $region82: #{forward.1} parent=79 // pred_check_branch
          %2151 = sbr.rel (%p2149) target = $region84
        $region83: #{forward.1} parent=79 // pred_region
          %s2153 = ssub.s32 16, 16
          %2154 = vsyncadd %s2146, %s2153
          %s2155 = smul.addr %s29, 16
          %s2156 = scalar_lea.hbm %s15, %s2155
          %s2158 = sshll.u32 %s2148, 4
          %s2159 = int_to_ptr.vmem [resolvable:$true] %s2158
          %2161 = dma.vmem_to_hbm [thread:$0]  %s2159, 16, %s2156, %s2146
        $region84: #{forward.1} parent=79 // pred_fallthru
          _
      $region80: #{forward.1} parent=5 // pred_fallthru
        _
      %p2162 = scmp.le.s32.totalorder 2, %s24
      // Predicated region
      $region85: #{forward.1} parent=5 // pred_check
        %p2163 = pneg %p2162
      $region86: #{forward.1} parent=5 // pred_check_branch
        %2165 = sbr.rel (%p2163) target = $region88
      $region87: #{forward.1} parent=5 // pred_region
        %s2166 = ssub.s32 %s24, 2
        // Predicated region
        $region89: #{forward.1} parent=87 // pred_check
          %p2167 = pneg %p373
        $region90: #{forward.1} parent=87 // pred_check_branch
          %2169 = sbr.rel (%p2167) target = $region92
        $region91: #{forward.1} parent=87 // pred_region
          %s2170 = sand.u32 %s358, 1
          %s2171 = scalar_lea.sflag [#allocation3], %s2170
          %s2172 = sand.u32 %s358, 1
          %s2173 = scalar_lea.vmem [#allocation2], %s2172
          %2174 = dma.done %s2171, 16
        $region92: #{forward.1} parent=87 // pred_fallthru
          _
      $region88: #{forward.1} parent=5 // pred_fallthru
        _
    $region6: #{forward.1} parent=1 // loop_footer
      %s28 = sadd.s32 1, %s24
    $region7: #{forward.1} parent=1 // loop_footer_branch
      %23 = sbr.rel target = $region3
    $region8: #{forward.1} parent=1 // loop_exit
      _
    %2175 = vsyncpa [#allocation3], 1
    %s2176 = scalar_lea.sflag [#allocation3], 1
    %2177 = vsyncpa %s2176, 1

</llo_original>
